<compile_context>
chip_gen: v7x
topology: tpu7x:2x2x1
jax: 0.10.0
libtpu: 0.0.40
codegen_flags: <defaults>
</compile_context>

<pallas_src>
import functools

import jax
import jax.numpy as jnp
from jax.experimental import pallas as pl
from jax.experimental.pallas import tpu as pltpu

LANE = 128
_VMEM_LIMIT = 32 * 1024 * 1024


def _round_up(n, m):
    return ((n + m - 1) // m) * m


def _pad_axis(a, axis, to):
    if a.shape[axis] == to:
        return a
    pad = [(0, 0)] * a.ndim
    pad[axis] = (0, to - a.shape[axis])
    return jnp.pad(a, pad)


def _pick_tile(total, cap, unit=1):
    """Largest divisor t of `total` with t <= cap and (t*unit) % 8 == 0, else `total`."""
    for t in range(min(cap, total), 0, -1):
        if total % t == 0 and (t * unit) % 8 == 0:
            return t
    return total


# ---------------------------------------------------------------------------
# Kernel 1: fused style path.
# style -> Linear(z,z) -> 4x [Linear(z,C) -> Swish -> Linear(C,C)]
# Produces the stacked (4, N, C) modulation tensor
# [gamma_up, beta_up, gamma_res, beta_res] in a single tiny pallas_call.
# ---------------------------------------------------------------------------
def _style_kernel(sty_ref, we_ref, be_ref, w1_ref, b1_ref, w2_ref, b2_ref, o_ref):
    s = jnp.dot(sty_ref[...], we_ref[...], preferred_element_type=jnp.float32)
    s = s + be_ref[...]
    for i in range(4):
        h = jnp.dot(s, w1_ref[i], preferred_element_type=jnp.float32) + b1_ref[i]
        h = h * jax.nn.sigmoid(h)                       # Swish
        o_ref[i] = jnp.dot(h, w2_ref[i], preferred_element_type=jnp.float32) + b2_ref[i]


def style_forward(style, kp):
    n, z = style.shape
    c = kp["mlp_w1"].shape[-1]
    return pl.pallas_call(
        _style_kernel,
        out_shape=jax.ShapeDtypeStruct((4, n, c), jnp.float32),
        grid_spec=pltpu.PrefetchScalarGridSpec(
            num_scalar_prefetch=0,
            grid=(1,),
            in_specs=[
                pl.BlockSpec((n, z), lambda i: (0, 0)),
                pl.BlockSpec((z, z), lambda i: (0, 0)),
                pl.BlockSpec((1, z), lambda i: (0, 0)),
                pl.BlockSpec((4, z, c), lambda i: (0, 0, 0)),
                pl.BlockSpec((4, 1, c), lambda i: (0, 0, 0)),
                pl.BlockSpec((4, c, c), lambda i: (0, 0, 0)),
                pl.BlockSpec((4, 1, c), lambda i: (0, 0, 0)),
            ],
            out_specs=pl.BlockSpec((4, n, c), lambda i: (0, 0, 0)),
        ),
        compiler_params=pltpu.CompilerParams(
            dimension_semantics=("arbitrary",), vmem_limit_bytes=_VMEM_LIMIT),
    )(style, kp["se_w"], kp["se_b"], kp["mlp_w1"], kp["mlp_b1"],
      kp["mlp_w2"], kp["mlp_b2"])


# ---------------------------------------------------------------------------
# Kernel 2: 5x5 "same" convolution (also used for the stride-2 transposed conv
# after zero insertion).  The pre-padded NHWC input stays in HBM
# (memory_space=pl.ANY); each grid step DMAs a (th+4)-row halo slab into a VMEM
# scratch and accumulates 25 shifted (rows, Cin) x (Cin, Cout) bf16 MXU matmuls
# in f32.  Per-tile per-channel sum / sum-of-squares are emitted as a second
# output so the following BatchNorm never re-reads the activation for stats.
# ---------------------------------------------------------------------------
def _conv5x5_kernel(xpad_ref, w_ref, b_ref, y_ref, st_ref, xbuf, *, th, wo):
    n = pl.program_id(0)
    r = pl.program_id(1)
    # output rows [r*th, r*th+th) need padded input rows [r*th, r*th+th+4)
    pltpu.sync_copy(xpad_ref.at[pl.ds(n, 1), pl.ds(r * th, th + 4)], xbuf)

    cin = xbuf.shape[-1]
    cout = w_ref.shape[-1]
    acc = jnp.zeros((th * wo, cout), jnp.float32)
    for ky in range(5):
        for kx in range(5):
            a = xbuf[0, ky:ky + th, kx:kx + wo, :]             # (th, wo, cin)
            a = a.reshape(th * wo, cin).astype(jnp.bfloat16)
            acc = acc + jnp.dot(a, w_ref[ky * 5 + kx],
                                preferred_element_type=jnp.float32)
    acc = acc + b_ref[...]

    y_ref[...] = acc[None]
    s1 = jnp.sum(acc, axis=0, keepdims=True)
    s2 = jnp.sum(acc * acc, axis=0, keepdims=True)
    st_ref[...] = jnp.concatenate([s1, s2], axis=0)[None, None]


def conv5x5(x_pad, w_taps, bias, *, ho, wo, row_target=512):
    n, hp, wp, cin = x_pad.shape
    cout = w_taps.shape[-1]
    assert hp == ho + 4 and wp == wo + 4
    th = _pick_tile(ho, max(1, row_target // wo), unit=wo)
    r_tiles = ho // th
    kernel = functools.partial(_conv5x5_kernel, th=th, wo=wo)
    y, st = pl.pallas_call(
        kernel,
        out_shape=(
            jax.ShapeDtypeStruct((n, ho * wo, cout), jnp.float32),
            jax.ShapeDtypeStruct((n, r_tiles, 2, cout), jnp.float32),
        ),
        grid_spec=pltpu.PrefetchScalarGridSpec(
            num_scalar_prefetch=0,
            grid=(n, r_tiles),
            in_specs=[
                pl.BlockSpec(memory_space=pl.ANY),                      # padded input (manual DMA)
                pl.BlockSpec((25, cin, cout), lambda b, r: (0, 0, 0)),  # taps (bf16)
                pl.BlockSpec((1, cout), lambda b, r: (0, 0)),           # bias
            ],
            out_specs=[
                pl.BlockSpec((1, th * wo, cout), lambda b, r: (b, r, 0)),
                pl.BlockSpec((1, 1, 2, cout), lambda b, r: (b, r, 0, 0)),
            ],
            scratch_shapes=[pltpu.VMEM((1, th + 4, wp, cin), x_pad.dtype)],
        ),
        compiler_params=pltpu.CompilerParams(
            dimension_semantics=("parallel", "parallel"),
            vmem_limit_bytes=_VMEM_LIMIT),
    )(x_pad, w_taps, bias)
    return y, st


# ---------------------------------------------------------------------------
# Kernel 3: BatchNorm "apply" pass (training-mode stats given as (2, C) mean/var)
# + affine or self-modulation (+1) + Swish, optionally fused with the residual
# add.  Row-tiled over (batch, row-tile); gamma/beta are indexed per batch
# element through the index_map (no jnp.repeat materialization).
# ---------------------------------------------------------------------------
def _bn_core(x, stat_ref, g_ref, b_ref, eps, add_one):
    mean = stat_ref[0:1, :]
    var = stat_ref[1:2, :]
    xhat = (x - mean) * jax.lax.rsqrt(var + eps)
    g = g_ref[...]
    if add_one:
        g = g + 1.0
    y = xhat * g + b_ref[...]
    return y * jax.nn.sigmoid(y)                        # Swish


def _bn_apply_kernel(x_ref, stat_ref, g_ref, b_ref, o_ref, *, eps, add_one):
    o_ref[...] = _bn_core(x_ref[...], stat_ref, g_ref, b_ref, eps, add_one)


def _bn_apply_res_kernel(x_ref, xin_ref, stat_ref, g_ref, b_ref, o_ref, *,
                         eps, add_one, alpha):
    y = _bn_core(x_ref[...], stat_ref, g_ref, b_ref, eps, add_one)
    o_ref[...] = xin_ref[...] + alpha * y


def bn_apply(x, stat, g, b, *, add_one, per_batch, eps,
             x_in=None, alpha=0.1, row_target=512):
    n, m, c = x.shape
    tr = _pick_tile(m, row_target)
    grid = (n, m // tr)

    x_spec = pl.BlockSpec((1, tr, c), lambda bi, ri: (bi, ri, 0))
    st_spec = pl.BlockSpec((2, c), lambda bi, ri: (0, 0))
    if per_batch:
        gb_spec = pl.BlockSpec((1, c), lambda bi, ri: (bi, 0))
    else:
        gb_spec = pl.BlockSpec((1, c), lambda bi, ri: (0, 0))

    if x_in is None:
        kernel = functools.partial(_bn_apply_kernel, eps=eps, add_one=add_one)
        in_specs = [x_spec, st_spec, gb_spec, gb_spec]
        args = (x, stat, g, b)
    else:
        kernel = functools.partial(_bn_apply_res_kernel, eps=eps,
                                   add_one=add_one, alpha=alpha)
        in_specs = [x_spec, x_spec, st_spec, gb_spec, gb_spec]
        args = (x, x_in, stat, g, b)

    return pl.pallas_call(
        kernel,
        out_shape=jax.ShapeDtypeStruct((n, m, c), jnp.float32),
        grid_spec=pltpu.PrefetchScalarGridSpec(
            num_scalar_prefetch=0,
            grid=grid,
            in_specs=in_specs,
            out_specs=pl.BlockSpec((1, tr, c), lambda bi, ri: (bi, ri, 0)),
        ),
        compiler_params=pltpu.CompilerParams(
            dimension_semantics=("parallel", "parallel"),
            vmem_limit_bytes=_VMEM_LIMIT),
    )(*args)


# ---------------------------------------------------------------------------
# Kernel 4: fused BN+Swish -> 1x1 conv (row matmul).  Normalizes the incoming
# row tile with the previous layer's stats, applies affine + Swish, multiplies
# by the (Cin, Cout) 1x1-conv weight on the MXU (bf16 in, f32 acc) and emits
# this layer's per-tile sum / sum-sq for the next BatchNorm.
# ---------------------------------------------------------------------------
def _bn_rowmm_kernel(x_ref, stat_ref, g_ref, b_ref, w_ref, wb_ref,
                     y_ref, st_ref, *, eps):
    h = _bn_core(x_ref[...], stat_ref, g_ref, b_ref, eps, add_one=False)
    acc = jnp.dot(h.astype(jnp.bfloat16), w_ref[...],
                  preferred_element_type=jnp.float32)
    acc = acc + wb_ref[...]
    y_ref[...] = acc
    s1 = jnp.sum(acc, axis=0, keepdims=True)
    s2 = jnp.sum(acc * acc, axis=0, keepdims=True)
    st_ref[...] = jnp.concatenate([s1, s2], axis=0)[None]


def bn_rowmm(x, stat, g, b, w, wb, *, eps, row_target=512):
    m, cin = x.shape
    cout = w.shape[-1]
    tr = _pick_tile(m, row_target)
    r_tiles = m // tr
    y, st = pl.pallas_call(
        functools.partial(_bn_rowmm_kernel, eps=eps),
        out_shape=(
            jax.ShapeDtypeStruct((m, cout), jnp.float32),
            jax.ShapeDtypeStruct((r_tiles, 2, cout), jnp.float32),
        ),
        grid_spec=pltpu.PrefetchScalarGridSpec(
            num_scalar_prefetch=0,
            grid=(r_tiles,),
            in_specs=[
                pl.BlockSpec((tr, cin), lambda r: (r, 0)),
                pl.BlockSpec((2, cin), lambda r: (0, 0)),
                pl.BlockSpec((1, cin), lambda r: (0, 0)),
                pl.BlockSpec((1, cin), lambda r: (0, 0)),
                pl.BlockSpec((cin, cout), lambda r: (0, 0)),
                pl.BlockSpec((1, cout), lambda r: (0, 0)),
            ],
            out_specs=[
                pl.BlockSpec((tr, cout), lambda r: (r, 0)),
                pl.BlockSpec((1, 2, cout), lambda r: (r, 0, 0)),
            ],
        ),
        compiler_params=pltpu.CompilerParams(
            dimension_semantics=("parallel",),
            vmem_limit_bytes=_VMEM_LIMIT),
    )(x, stat, g, b, w, wb)
    return y, st


# ---------------------------------------------------------------------------
# Plain-JAX glue: spatial padding / stride-2 zero insertion, parameter layout
# conversion, tiny cross-tile statistic reduction, forward orchestration.
# ---------------------------------------------------------------------------
def finalize_stats(partial, count):
    """(..., 2, C) partial sums -> (2, C) [mean; biased var]."""
    s = jnp.sum(partial.reshape(-1, 2, partial.shape[-1]), axis=0)
    mean = s[0] / count
    var = jnp.maximum(s[1] / count - mean * mean, 0.0)
    return jnp.stack([mean, var], axis=0)


def _pad_spatial2(x_nhwc):
    return jnp.pad(x_nhwc, ((0, 0), (2, 2), (2, 2), (0, 0)))


def _zero_insert_pad(x_nhwc):
    """Stride-2 zero insertion + padding that turns ConvTranspose2d
    (k=5, s=2, p=2, output_padding=1) into a plain 5x5 'valid' conv."""
    n, h, w, c = x_nhwc.shape
    out = jnp.zeros((n, 2 * h + 4, 2 * w + 4, c), x_nhwc.dtype)
    return out.at[:, 2:2 * h + 2:2, 2:2 * w + 2:2, :].set(x_nhwc)


def init_torch_params(key, in_c, out_c, z_dim):
    """Random parameters in the PyTorch layouts of UpsampleBlock."""
    ks = iter(jax.random.split(key, 40))

    def w(shape, scale=0.1):
        return scale * jax.random.normal(next(ks), shape, dtype=jnp.float32)

    c2 = out_c // 2
    return dict(
        # _style_extract: Linear(z, z)
        se_w=w((z_dim, z_dim)), se_b=w((z_dim,)),
        # noise weights (PyTorch inits them to zeros)
        noise_w=jnp.zeros((in_c,), jnp.float32),
        # _conv: ConvTranspose2d(in_c, out_c, 5, stride=2, padding=2, output_padding=1)
        deconv_w=w((in_c, out_c, 5, 5)), deconv_b=w((out_c,)),
        # _bn: SelfModulateBatchNorm2d(out_c, z) modulation MLPs
        bn0_gamma_w1=w((out_c, z_dim)), bn0_gamma_b1=w((out_c,)),
        bn0_gamma_w2=w((out_c, out_c)), bn0_gamma_b2=w((out_c,)),
        bn0_beta_w1=w((out_c, z_dim)), bn0_beta_b1=w((out_c,)),
        bn0_beta_w2=w((out_c, out_c)), bn0_beta_b2=w((out_c,)),
        # _res._seq
        conv1_w=w((out_c, out_c, 5, 5)), conv1_b=w((out_c,)),
        rbn1_g=1.0 + w((out_c,)), rbn1_b=w((out_c,)),
        conv2_w=w((c2, out_c)), conv2_b=w((c2,)),                 # 1x1 conv (O, I)
        rbn2_g=1.0 + w((c2,)), rbn2_b=w((c2,)),
        conv3_w=w((out_c, c2, 5, 5)), conv3_b=w((out_c,)),
        # _res._bn modulation MLPs
        rbn3_gamma_w1=w((out_c, z_dim)), rbn3_gamma_b1=w((out_c,)),
        rbn3_gamma_w2=w((out_c, out_c)), rbn3_gamma_b2=w((out_c,)),
        rbn3_beta_w1=w((out_c, z_dim)), rbn3_beta_b1=w((out_c,)),
        rbn3_beta_w2=w((out_c, out_c)), rbn3_beta_b2=w((out_c,)),
    )


def prepare_params(tp, in_c, out_c, z_dim):
    """PyTorch layouts -> kernel layouts (transpose/flip, channel padding to a
    multiple of 128 on the lane axis, bf16 matmul weights)."""
    cin_p = _round_up(in_c, LANE)
    c_p = _round_up(out_c, LANE)
    c2_p = _round_up(out_c // 2, LANE)

    def conv_taps(w_oihw, cinp, coutp):             # Conv2d weight (O, I, 5, 5)
        o, i = w_oihw.shape[0], w_oihw.shape[1]
        ww = jnp.transpose(w_oihw, (2, 3, 1, 0)).reshape(25, i, o)
        return _pad_axis(_pad_axis(ww, 1, cinp), 2, coutp).astype(jnp.bfloat16)

    def deconv_taps(w_iohw, cinp, coutp):           # ConvTranspose2d weight (I, O, 5, 5)
        i, o = w_iohw.shape[0], w_iohw.shape[1]
        ww = jnp.flip(w_iohw, axis=(2, 3))
        ww = jnp.transpose(ww, (2, 3, 0, 1)).reshape(25, i, o)
        return _pad_axis(_pad_axis(ww, 1, cinp), 2, coutp).astype(jnp.bfloat16)

    def brow(b, coutp):
        return _pad_axis(b.reshape(1, -1), 1, coutp).astype(jnp.float32)

    def lin(w_oi, outp, inp=None):                  # Linear weight (out, in) -> (in, out)
        ww = jnp.transpose(w_oi)
        ww = _pad_axis(ww, 1, outp)
        if inp is not None:
            ww = _pad_axis(ww, 0, inp)
        return ww.astype(jnp.float32)

    w1s, b1s, w2s, b2s = [], [], [], []
    for name in ("bn0_gamma", "bn0_beta", "rbn3_gamma", "rbn3_beta"):
        w1s.append(lin(tp[name + "_w1"], c_p))
        b1s.append(brow(tp[name + "_b1"], c_p))
        w2s.append(lin(tp[name + "_w2"], c_p, c_p))
        b2s.append(brow(tp[name + "_b2"], c_p))

    return dict(
        in_c=in_c, out_c=out_c, cin_p=cin_p, c_p=c_p, c2_p=c2_p,
        se_w=jnp.transpose(tp["se_w"]).astype(jnp.float32),
        se_b=tp["se_b"].reshape(1, -1).astype(jnp.float32),
        mlp_w1=jnp.stack(w1s), mlp_b1=jnp.stack(b1s),
        mlp_w2=jnp.stack(w2s), mlp_b2=jnp.stack(b2s),
        noise_w=tp["noise_w"].astype(jnp.float32),
        deconv_taps=deconv_taps(tp["deconv_w"], cin_p, c_p),
        deconv_b=brow(tp["deconv_b"], c_p),
        conv1_taps=conv_taps(tp["conv1_w"], c_p, c_p),
        conv1_b=brow(tp["conv1_b"], c_p),
        bn1_g=brow(tp["rbn1_g"], c_p), bn1_b=brow(tp["rbn1_b"], c_p),
        conv2_w=_pad_axis(_pad_axis(jnp.transpose(tp["conv2_w"]), 0, c_p), 1, c2_p
                          ).astype(jnp.bfloat16),
        conv2_b=brow(tp["conv2_b"], c2_p),
        bn2_g=brow(tp["rbn2_g"], c2_p), bn2_b=brow(tp["rbn2_b"], c2_p),
        conv3_taps=conv_taps(tp["conv3_w"], c2_p, c_p),
        conv3_b=brow(tp["conv3_b"], c_p),
    )


def upsample_block_forward(x_nchw, style, kp, *, noise=None, alpha=0.1, eps=1e-5):
    """UpsampleBlock.forward (training-mode BN, need_trunc=False).
    x_nchw: (N, in_c, H, W); style: (N, z_dim) -> (N, out_c, 2H, 2W)."""
    n, _, h, w = x_nchw.shape
    cin_p, c_p, c2_p, out_c = kp["cin_p"], kp["c_p"], kp["c2_p"], kp["out_c"]

    # optional noise injection: x + noise_weights[None,:,None,None] * noise
    if noise is not None:
        x_nchw = x_nchw + kp["noise_w"][None, :, None, None] * noise
    # TODO(synk): TruncationLayer (training-only, need_trunc=True path) is not
    # implemented; we port the default need_trunc=False forward.

    x = jnp.transpose(x_nchw, (0, 2, 3, 1)).astype(jnp.float32)
    x = _pad_axis(x, 3, cin_p)

    # fused style path: gamma/beta for both self-modulated BatchNorms
    mods = style_forward(style.astype(jnp.float32), kp)               # (4, N, c_p)
    g_up, b_up, g_res, b_res = mods[0], mods[1], mods[2], mods[3]

    ho, wo = 2 * h, 2 * w
    hw = ho * wo

    # --- self._conv : ConvTranspose2d(k=5, s=2, p=2, op=1) -------------------
    y0, st0 = conv5x5(_zero_insert_pad(x), kp["deconv_taps"], kp["deconv_b"],
                      ho=ho, wo=wo)
    m0 = finalize_stats(st0, n * hw)

    # --- self._bn (SelfModulateBatchNorm2d) + self._act (Swish) --------------
    x_res_in = bn_apply(y0, m0, g_up, b_up, add_one=True, per_batch=True, eps=eps)

    # --- self._res (StyleResidualBlock) --------------------------------------
    # Conv2d(C, C, 5, pad=2)
    h1, st1 = conv5x5(_pad_spatial2(x_res_in.reshape(n, ho, wo, c_p)),
                      kp["conv1_taps"], kp["conv1_b"], ho=ho, wo=wo)
    m1 = finalize_stats(st1, n * hw)

    # BN(C) + Swish fused with Conv2d(C, C//2, 1)
    h2, st2 = bn_rowmm(h1.reshape(n * hw, c_p), m1, kp["bn1_g"], kp["bn1_b"],
                       kp["conv2_w"], kp["conv2_b"], eps=eps)
    m2 = finalize_stats(st2, n * hw)

    # BN(C//2) + Swish
    h3 = bn_apply(h2.reshape(n, hw, c2_p), m2, kp["bn2_g"], kp["bn2_b"],
                  add_one=False, per_batch=False, eps=eps)

    # Conv2d(C//2, C, 5, pad=2)
    h4, st3 = conv5x5(_pad_spatial2(h3.reshape(n, ho, wo, c2_p)),
                      kp["conv3_taps"], kp["conv3_b"], ho=ho, wo=wo)
    m3 = finalize_stats(st3, n * hw)

    # SelfModulateBatchNorm2d + Swish + residual (x_in + alpha * y)
    out = bn_apply(h4, m3, g_res, b_res, add_one=True, per_batch=True, eps=eps,
                   x_in=x_res_in, alpha=alpha)

    out = out.reshape(n, ho, wo, c_p)[:, :, :, :out_c]
    return jnp.transpose(out, (0, 3, 1, 2))


# ---------------------------------------------------------------------------
# Pure-JAX f32 reference (mirrors the PyTorch module, training-mode BN).
# ---------------------------------------------------------------------------
def reference_forward(x, style, tp, *, alpha=0.1, eps=1e-5):
    def swish(a):
        return a * jax.nn.sigmoid(a)

    def linear(a, w, b):
        return a @ w.T + b

    def bn_train(a, gamma=None, beta=None):
        mean = jnp.mean(a, axis=(0, 2, 3), keepdims=True)
        var = jnp.mean(jnp.square(a - mean), axis=(0, 2, 3), keepdims=True)
        y = (a - mean) * jax.lax.rsqrt(var + eps)
        if gamma is not None:
            y = y * gamma[None, :, None, None] + beta[None, :, None, None]
        return y

    def conv2d(a, w, b, pad):
        y = jax.lax.conv_general_dilated(
            a, w, (1, 1), [(pad, pad), (pad, pad)],
            dimension_numbers=("NCHW", "OIHW", "NCHW"))
        return y + b[None, :, None, None]

    def deconv(a, w, b):
        wf = jnp.transpose(jnp.flip(w, axis=(2, 3)), (1, 0, 2, 3))
        y = jax.lax.conv_general_dilated(
            a, wf, (1, 1), [(2, 3), (2, 3)], lhs_dilation=(2, 2),
            dimension_numbers=("NCHW", "OIHW", "NCHW"))
        return y + b[None, :, None, None]

    s = linear(style, tp["se_w"], tp["se_b"])

    def mod(prefix):
        hh = swish(linear(s, tp[prefix + "_w1"], tp[prefix + "_b1"]))
        return linear(hh, tp[prefix + "_w2"], tp[prefix + "_b2"])

    def selfmod(a, g, b):
        return bn_train(a) * (g[:, :, None, None] + 1.0) + b[:, :, None, None]

    y = deconv(x, tp["deconv_w"], tp["deconv_b"])
    y = swish(selfmod(y, mod("bn0_gamma"), mod("bn0_beta")))
    x_in = y
    r = conv2d(y, tp["conv1_w"], tp["conv1_b"], 2)
    r = swish(bn_train(r, tp["rbn1_g"], tp["rbn1_b"]))
    r = conv2d(r, tp["conv2_w"][:, :, None, None], tp["conv2_b"], 0)
    r = swish(bn_train(r, tp["rbn2_g"], tp["rbn2_b"]))
    r = conv2d(r, tp["conv3_w"], tp["conv3_b"], 2)
    r = swish(selfmod(r, mod("rbn3_gamma"), mod("rbn3_beta")))
    return x_in + alpha * r


# ---------------------------------------------------------------------------
if __name__ == "__main__":
    key = jax.random.PRNGKey(0)
    k_x, k_s, k_p = jax.random.split(key, 3)

    N, in_c, out_c, H, W, z_dim = 2, 4, 8, 16, 16, 16

    x = jax.random.normal(k_x, (N, in_c, H, W), dtype=jnp.float32)
    style = jax.random.normal(k_s, (N, z_dim), dtype=jnp.float32)

    tp = init_torch_params(k_p, in_c, out_c, z_dim)
    kp = prepare_params(tp, in_c, out_c, z_dim)

    out = upsample_block_forward(x, style, kp)
    out = jax.block_until_ready(out)

    assert out.shape == (N, out_c, 2 * H, 2 * W), out.shape
    assert bool(jnp.all(jnp.isfinite(out)))

    # loose check vs. a pure-JAX f32 reference (kernel matmuls run in bf16)
    ref = reference_forward(x, style, tp)
    err = float(jnp.max(jnp.abs(out - ref)))
    assert err < 0.1, f"max abs err vs reference: {err}"

    print("KERNEL_OK")
</pallas_src>

<mosaic_0001>
module attributes {stable_mosaic.version = 11 : i64} {
  func.func @_style_kernel(%arg0: i32, %arg1: memref<2x16xf32, #tpu.memory_space<vmem>>, %arg2: memref<16x16xf32, #tpu.memory_space<vmem>>, %arg3: memref<1x16xf32, #tpu.memory_space<vmem>>, %arg4: memref<4x16x128xf32, #tpu.memory_space<vmem>>, %arg5: memref<4x1x128xf32, #tpu.memory_space<vmem>>, %arg6: memref<4x128x128xf32, #tpu.memory_space<vmem>>, %arg7: memref<4x1x128xf32, #tpu.memory_space<vmem>>, %arg8: memref<4x2x128xf32, #tpu.memory_space<vmem>>) attributes {dimension_semantics = [#tpu.dimension_semantics<arbitrary>], iteration_bounds = array<i64: 1>, scalar_prefetch = 0 : i64, scratch_operands = 0 : i64, tpu.core_type = #tpu.core_type<tc>, window_params = [{pipeline_mode = #tpu.pipeline_mode<synchronous>, transform_indices = @transform_0, window_bounds = array<i64: 2, 16>}, {pipeline_mode = #tpu.pipeline_mode<synchronous>, transform_indices = @transform_1, window_bounds = array<i64: 16, 16>}, {pipeline_mode = #tpu.pipeline_mode<synchronous>, transform_indices = @transform_2, window_bounds = array<i64: 1, 16>}, {pipeline_mode = #tpu.pipeline_mode<synchronous>, transform_indices = @transform_3, window_bounds = array<i64: 4, 16, 128>}, {pipeline_mode = #tpu.pipeline_mode<synchronous>, transform_indices = @transform_4, window_bounds = array<i64: 4, 1, 128>}, {pipeline_mode = #tpu.pipeline_mode<synchronous>, transform_indices = @transform_5, window_bounds = array<i64: 4, 128, 128>}, {pipeline_mode = #tpu.pipeline_mode<synchronous>, transform_indices = @transform_6, window_bounds = array<i64: 4, 1, 128>}, {pipeline_mode = #tpu.pipeline_mode<synchronous>, transform_indices = @transform_7, window_bounds = array<i64: 4, 2, 128>}]} {
    %c0 = arith.constant 0 : index
    %c0_0 = arith.constant 0 : index
    %0 = vector.load %arg1[%c0, %c0_0] : memref<2x16xf32, #tpu.memory_space<vmem>>, vector<2x16xf32>
    %c0_1 = arith.constant 0 : index
    %c0_2 = arith.constant 0 : index
    %1 = vector.load %arg2[%c0_1, %c0_2] : memref<16x16xf32, #tpu.memory_space<vmem>>, vector<16x16xf32>
    %cst = arith.constant dense<0.000000e+00> : vector<2x16xf32>
    %2 = tpu.matmul %0, %1, %cst {dimension_numbers = #tpu.dot_dimension_numbers<[1], [0], [0], [1], [0, 0, 1, 1], [], []>} : vector<2x16xf32>, vector<16x16xf32>, vector<2x16xf32> -> vector<2x16xf32>
    %c0_3 = arith.constant 0 : index
    %c0_4 = arith.constant 0 : index
    %3 = vector.load %arg3[%c0_3, %c0_4] : memref<1x16xf32, #tpu.memory_space<vmem>>, vector<1x16xf32>
    %4 = vector.broadcast %3 : vector<1x16xf32> to vector<2x16xf32>
    %5 = arith.addf %2, %4 : vector<2x16xf32>
    %c0_5 = arith.constant 0 : index
    %c0_6 = arith.constant 0 : index
    %c0_7 = arith.constant 0 : index
    %6 = vector.load %arg4[%c0_5, %c0_6, %c0_7] : memref<4x16x128xf32, #tpu.memory_space<vmem>>, vector<1x16x128xf32>
    %7 = vector.shape_cast %6 : vector<1x16x128xf32> to vector<16x128xf32>
    %cst_8 = arith.constant dense<0.000000e+00> : vector<2x128xf32>
    %8 = tpu.matmul %5, %7, %cst_8 {dimension_numbers = #tpu.dot_dimension_numbers<[1], [0], [0], [1], [0, 0, 1, 1], [], []>} : vector<2x16xf32>, vector<16x128xf32>, vector<2x128xf32> -> vector<2x128xf32>
    %c0_9 = arith.constant 0 : index
    %c0_10 = arith.constant 0 : index
    %c0_11 = arith.constant 0 : index
    %9 = vector.load %arg5[%c0_9, %c0_10, %c0_11] : memref<4x1x128xf32, #tpu.memory_space<vmem>>, vector<1x1x128xf32>
    %10 = vector.shape_cast %9 : vector<1x1x128xf32> to vector<1x128xf32>
    %11 = vector.broadcast %10 : vector<1x128xf32> to vector<2x128xf32>
    %12 = arith.addf %8, %11 : vector<2x128xf32>
    %13 = arith.negf %12 : vector<2x128xf32>
    %14 = math.exp %13 : vector<2x128xf32>
    %cst_12 = arith.constant 1.000000e+00 : f32
    %15 = vector.broadcast %cst_12 : f32 to vector<2x128xf32>
    %16 = arith.addf %15, %14 : vector<2x128xf32>
    %17 = arith.divf %15, %16 : vector<2x128xf32>
    %18 = arith.mulf %12, %17 : vector<2x128xf32>
    %c0_13 = arith.constant 0 : index
    %c0_14 = arith.constant 0 : index
    %c0_15 = arith.constant 0 : index
    %19 = vector.load %arg6[%c0_13, %c0_14, %c0_15] : memref<4x128x128xf32, #tpu.memory_space<vmem>>, vector<1x128x128xf32>
    %20 = vector.shape_cast %19 : vector<1x128x128xf32> to vector<128x128xf32>
    %cst_16 = arith.constant dense<0.000000e+00> : vector<2x128xf32>
    %21 = tpu.matmul %18, %20, %cst_16 {dimension_numbers = #tpu.dot_dimension_numbers<[1], [0], [0], [1], [0, 0, 1, 1], [], []>} : vector<2x128xf32>, vector<128x128xf32>, vector<2x128xf32> -> vector<2x128xf32>
    %c0_17 = arith.constant 0 : index
    %c0_18 = arith.constant 0 : index
    %c0_19 = arith.constant 0 : index
    %22 = vector.load %arg7[%c0_17, %c0_18, %c0_19] : memref<4x1x128xf32, #tpu.memory_space<vmem>>, vector<1x1x128xf32>
    %23 = vector.shape_cast %22 : vector<1x1x128xf32> to vector<1x128xf32>
    %24 = vector.broadcast %23 : vector<1x128xf32> to vector<2x128xf32>
    %25 = arith.addf %21, %24 : vector<2x128xf32>
    %c0_20 = arith.constant 0 : index
    %c0_21 = arith.constant 0 : index
    %c0_22 = arith.constant 0 : index
    %26 = vector.load %arg8[%c0_20, %c0_21, %c0_22] : memref<4x2x128xf32, #tpu.memory_space<vmem>>, vector<1x2x128xf32>
    %27 = vector.shape_cast %26 : vector<1x2x128xf32> to vector<2x128xf32>
    %28 = vector.shape_cast %25 : vector<2x128xf32> to vector<1x2x128xf32>
    tpu.vector_store %arg8[%c0_20, %c0_21, %c0_22], %28 {strides = array<i32>} : memref<4x2x128xf32, #tpu.memory_space<vmem>>, vector<1x2x128xf32>,
    %c1 = arith.constant 1 : index
    %c0_23 = arith.constant 0 : index
    %c0_24 = arith.constant 0 : index
    %29 = vector.load %arg4[%c1, %c0_23, %c0_24] : memref<4x16x128xf32, #tpu.memory_space<vmem>>, vector<1x16x128xf32>
    %30 = vector.shape_cast %29 : vector<1x16x128xf32> to vector<16x128xf32>
    %cst_25 = arith.constant dense<0.000000e+00> : vector<2x128xf32>
    %31 = tpu.matmul %5, %30, %cst_25 {dimension_numbers = #tpu.dot_dimension_numbers<[1], [0], [0], [1], [0, 0, 1, 1], [], []>} : vector<2x16xf32>, vector<16x128xf32>, vector<2x128xf32> -> vector<2x128xf32>
    %c1_26 = arith.constant 1 : index
    %c0_27 = arith.constant 0 : index
    %c0_28 = arith.constant 0 : index
    %32 = vector.load %arg5[%c1_26, %c0_27, %c0_28] : memref<4x1x128xf32, #tpu.memory_space<vmem>>, vector<1x1x128xf32>
    %33 = vector.shape_cast %32 : vector<1x1x128xf32> to vector<1x128xf32>
    %34 = vector.broadcast %33 : vector<1x128xf32> to vector<2x128xf32>
    %35 = arith.addf %31, %34 : vector<2x128xf32>
    %36 = arith.negf %35 : vector<2x128xf32>
    %37 = math.exp %36 : vector<2x128xf32>
    %cst_29 = arith.constant 1.000000e+00 : f32
    %38 = vector.broadcast %cst_29 : f32 to vector<2x128xf32>
    %39 = arith.addf %38, %37 : vector<2x128xf32>
    %40 = arith.divf %38, %39 : vector<2x128xf32>
    %41 = arith.mulf %35, %40 : vector<2x128xf32>
    %c1_30 = arith.constant 1 : index
    %c0_31 = arith.constant 0 : index
    %c0_32 = arith.constant 0 : index
    %42 = vector.load %arg6[%c1_30, %c0_31, %c0_32] : memref<4x128x128xf32, #tpu.memory_space<vmem>>, vector<1x128x128xf32>
    %43 = vector.shape_cast %42 : vector<1x128x128xf32> to vector<128x128xf32>
    %cst_33 = arith.constant dense<0.000000e+00> : vector<2x128xf32>
    %44 = tpu.matmul %41, %43, %cst_33 {dimension_numbers = #tpu.dot_dimension_numbers<[1], [0], [0], [1], [0, 0, 1, 1], [], []>} : vector<2x128xf32>, vector<128x128xf32>, vector<2x128xf32> -> vector<2x128xf32>
    %c1_34 = arith.constant 1 : index
    %c0_35 = arith.constant 0 : index
    %c0_36 = arith.constant 0 : index
    %45 = vector.load %arg7[%c1_34, %c0_35, %c0_36] : memref<4x1x128xf32, #tpu.memory_space<vmem>>, vector<1x1x128xf32>
    %46 = vector.shape_cast %45 : vector<1x1x128xf32> to vector<1x128xf32>
    %47 = vector.broadcast %46 : vector<1x128xf32> to vector<2x128xf32>
    %48 = arith.addf %44, %47 : vector<2x128xf32>
    %c1_37 = arith.constant 1 : index
    %c0_38 = arith.constant 0 : index
    %c0_39 = arith.constant 0 : index
    %49 = vector.load %arg8[%c1_37, %c0_38, %c0_39] : memref<4x2x128xf32, #tpu.memory_space<vmem>>, vector<1x2x128xf32>
    %50 = vector.shape_cast %49 : vector<1x2x128xf32> to vector<2x128xf32>
    %51 = vector.shape_cast %48 : vector<2x128xf32> to vector<1x2x128xf32>
    tpu.vector_store %arg8[%c1_37, %c0_38, %c0_39], %51 {strides = array<i32>} : memref<4x2x128xf32, #tpu.memory_space<vmem>>, vector<1x2x128xf32>,
    %c2 = arith.constant 2 : index
    %c0_40 = arith.constant 0 : index
    %c0_41 = arith.constant 0 : index
    %52 = vector.load %arg4[%c2, %c0_40, %c0_41] : memref<4x16x128xf32, #tpu.memory_space<vmem>>, vector<1x16x128xf32>
    %53 = vector.shape_cast %52 : vector<1x16x128xf32> to vector<16x128xf32>
    %cst_42 = arith.constant dense<0.000000e+00> : vector<2x128xf32>
    %54 = tpu.matmul %5, %53, %cst_42 {dimension_numbers = #tpu.dot_dimension_numbers<[1], [0], [0], [1], [0, 0, 1, 1], [], []>} : vector<2x16xf32>, vector<16x128xf32>, vector<2x128xf32> -> vector<2x128xf32>
    %c2_43 = arith.constant 2 : index
    %c0_44 = arith.constant 0 : index
    %c0_45 = arith.constant 0 : index
    %55 = vector.load %arg5[%c2_43, %c0_44, %c0_45] : memref<4x1x128xf32, #tpu.memory_space<vmem>>, vector<1x1x128xf32>
    %56 = vector.shape_cast %55 : vector<1x1x128xf32> to vector<1x128xf32>
    %57 = vector.broadcast %56 : vector<1x128xf32> to vector<2x128xf32>
    %58 = arith.addf %54, %57 : vector<2x128xf32>
    %59 = arith.negf %58 : vector<2x128xf32>
    %60 = math.exp %59 : vector<2x128xf32>
    %cst_46 = arith.constant 1.000000e+00 : f32
    %61 = vector.broadcast %cst_46 : f32 to vector<2x128xf32>
    %62 = arith.addf %61, %60 : vector<2x128xf32>
    %63 = arith.divf %61, %62 : vector<2x128xf32>
    %64 = arith.mulf %58, %63 : vector<2x128xf32>
    %c2_47 = arith.constant 2 : index
    %c0_48 = arith.constant 0 : index
    %c0_49 = arith.constant 0 : index
    %65 = vector.load %arg6[%c2_47, %c0_48, %c0_49] : memref<4x128x128xf32, #tpu.memory_space<vmem>>, vector<1x128x128xf32>
    %66 = vector.shape_cast %65 : vector<1x128x128xf32> to vector<128x128xf32>
    %cst_50 = arith.constant dense<0.000000e+00> : vector<2x128xf32>
    %67 = tpu.matmul %64, %66, %cst_50 {dimension_numbers = #tpu.dot_dimension_numbers<[1], [0], [0], [1], [0, 0, 1, 1], [], []>} : vector<2x128xf32>, vector<128x128xf32>, vector<2x128xf32> -> vector<2x128xf32>
    %c2_51 = arith.constant 2 : index
    %c0_52 = arith.constant 0 : index
    %c0_53 = arith.constant 0 : index
    %68 = vector.load %arg7[%c2_51, %c0_52, %c0_53] : memref<4x1x128xf32, #tpu.memory_space<vmem>>, vector<1x1x128xf32>
    %69 = vector.shape_cast %68 : vector<1x1x128xf32> to vector<1x128xf32>
    %70 = vector.broadcast %69 : vector<1x128xf32> to vector<2x128xf32>
    %71 = arith.addf %67, %70 : vector<2x128xf32>
    %c2_54 = arith.constant 2 : index
    %c0_55 = arith.constant 0 : index
    %c0_56 = arith.constant 0 : index
    %72 = vector.load %arg8[%c2_54, %c0_55, %c0_56] : memref<4x2x128xf32, #tpu.memory_space<vmem>>, vector<1x2x128xf32>
    %73 = vector.shape_cast %72 : vector<1x2x128xf32> to vector<2x128xf32>
    %74 = vector.shape_cast %71 : vector<2x128xf32> to vector<1x2x128xf32>
    tpu.vector_store %arg8[%c2_54, %c0_55, %c0_56], %74 {strides = array<i32>} : memref<4x2x128xf32, #tpu.memory_space<vmem>>, vector<1x2x128xf32>,
    %c3 = arith.constant 3 : index
    %c0_57 = arith.constant 0 : index
    %c0_58 = arith.constant 0 : index
    %75 = vector.load %arg4[%c3, %c0_57, %c0_58] : memref<4x16x128xf32, #tpu.memory_space<vmem>>, vector<1x16x128xf32>
    %76 = vector.shape_cast %75 : vector<1x16x128xf32> to vector<16x128xf32>
    %cst_59 = arith.constant dense<0.000000e+00> : vector<2x128xf32>
    %77 = tpu.matmul %5, %76, %cst_59 {dimension_numbers = #tpu.dot_dimension_numbers<[1], [0], [0], [1], [0, 0, 1, 1], [], []>} : vector<2x16xf32>, vector<16x128xf32>, vector<2x128xf32> -> vector<2x128xf32>
    %c3_60 = arith.constant 3 : index
    %c0_61 = arith.constant 0 : index
    %c0_62 = arith.constant 0 : index
    %78 = vector.load %arg5[%c3_60, %c0_61, %c0_62] : memref<4x1x128xf32, #tpu.memory_space<vmem>>, vector<1x1x128xf32>
    %79 = vector.shape_cast %78 : vector<1x1x128xf32> to vector<1x128xf32>
    %80 = vector.broadcast %79 : vector<1x128xf32> to vector<2x128xf32>
    %81 = arith.addf %77, %80 : vector<2x128xf32>
    %82 = arith.negf %81 : vector<2x128xf32>
    %83 = math.exp %82 : vector<2x128xf32>
    %cst_63 = arith.constant 1.000000e+00 : f32
    %84 = vector.broadcast %cst_63 : f32 to vector<2x128xf32>
    %85 = arith.addf %84, %83 : vector<2x128xf32>
    %86 = arith.divf %84, %85 : vector<2x128xf32>
    %87 = arith.mulf %81, %86 : vector<2x128xf32>
    %c3_64 = arith.constant 3 : index
    %c0_65 = arith.constant 0 : index
    %c0_66 = arith.constant 0 : index
    %88 = vector.load %arg6[%c3_64, %c0_65, %c0_66] : memref<4x128x128xf32, #tpu.memory_space<vmem>>, vector<1x128x128xf32>
    %89 = vector.shape_cast %88 : vector<1x128x128xf32> to vector<128x128xf32>
    %cst_67 = arith.constant dense<0.000000e+00> : vector<2x128xf32>
    %90 = tpu.matmul %87, %89, %cst_67 {dimension_numbers = #tpu.dot_dimension_numbers<[1], [0], [0], [1], [0, 0, 1, 1], [], []>} : vector<2x128xf32>, vector<128x128xf32>, vector<2x128xf32> -> vector<2x128xf32>
    %c3_68 = arith.constant 3 : index
    %c0_69 = arith.constant 0 : index
    %c0_70 = arith.constant 0 : index
    %91 = vector.load %arg7[%c3_68, %c0_69, %c0_70] : memref<4x1x128xf32, #tpu.memory_space<vmem>>, vector<1x1x128xf32>
    %92 = vector.shape_cast %91 : vector<1x1x128xf32> to vector<1x128xf32>
    %93 = vector.broadcast %92 : vector<1x128xf32> to vector<2x128xf32>
    %94 = arith.addf %90, %93 : vector<2x128xf32>
    %c3_71 = arith.constant 3 : index
    %c0_72 = arith.constant 0 : index
    %c0_73 = arith.constant 0 : index
    %95 = vector.load %arg8[%c3_71, %c0_72, %c0_73] : memref<4x2x128xf32, #tpu.memory_space<vmem>>, vector<1x2x128xf32>
    %96 = vector.shape_cast %95 : vector<1x2x128xf32> to vector<2x128xf32>
    %97 = vector.shape_cast %94 : vector<2x128xf32> to vector<1x2x128xf32>
    tpu.vector_store %arg8[%c3_71, %c0_72, %c0_73], %97 {strides = array<i32>} : memref<4x2x128xf32, #tpu.memory_space<vmem>>, vector<1x2x128xf32>,
    return
  }
  func.func @transform_0(%arg0: i32) -> (i32, i32) {
    %c0_i32 = arith.constant 0 : i32
    %c0_i32_0 = arith.constant 0 : i32
    %c0_i32_1 = arith.constant 0 : i32
    return %c0_i32, %c0_i32_0 : i32, i32
  }
  func.func @transform_1(%arg0: i32) -> (i32, i32) {
    %c0_i32 = arith.constant 0 : i32
    %c0_i32_0 = arith.constant 0 : i32
    %c0_i32_1 = arith.constant 0 : i32
    return %c0_i32, %c0_i32_0 : i32, i32
  }
  func.func @transform_2(%arg0: i32) -> (i32, i32) {
    %c0_i32 = arith.constant 0 : i32
    %c0_i32_0 = arith.constant 0 : i32
    %c0_i32_1 = arith.constant 0 : i32
    return %c0_i32, %c0_i32_0 : i32, i32
  }
  func.func @transform_3(%arg0: i32) -> (i32, i32, i32) {
    %c0_i32 = arith.constant 0 : i32
    %c0_i32_0 = arith.constant 0 : i32
    %c0_i32_1 = arith.constant 0 : i32
    %c0_i32_2 = arith.constant 0 : i32
    return %c0_i32, %c0_i32_0, %c0_i32_1 : i32, i32, i32
  }
  func.func @transform_4(%arg0: i32) -> (i32, i32, i32) {
    %c0_i32 = arith.constant 0 : i32
    %c0_i32_0 = arith.constant 0 : i32
    %c0_i32_1 = arith.constant 0 : i32
    %c0_i32_2 = arith.constant 0 : i32
    return %c0_i32, %c0_i32_0, %c0_i32_1 : i32, i32, i32
  }
  func.func @transform_5(%arg0: i32) -> (i32, i32, i32) {
    %c0_i32 = arith.constant 0 : i32
    %c0_i32_0 = arith.constant 0 : i32
    %c0_i32_1 = arith.constant 0 : i32
    %c0_i32_2 = arith.constant 0 : i32
    return %c0_i32, %c0_i32_0, %c0_i32_1 : i32, i32, i32
  }
  func.func @transform_6(%arg0: i32) -> (i32, i32, i32) {
    %c0_i32 = arith.constant 0 : i32
    %c0_i32_0 = arith.constant 0 : i32
    %c0_i32_1 = arith.constant 0 : i32
    %c0_i32_2 = arith.constant 0 : i32
    return %c0_i32, %c0_i32_0, %c0_i32_1 : i32, i32, i32
  }
  func.func @transform_7(%arg0: i32) -> (i32, i32, i32) {
    %c0_i32 = arith.constant 0 : i32
    %c0_i32_0 = arith.constant 0 : i32
    %c0_i32_1 = arith.constant 0 : i32
    %c0_i32_2 = arith.constant 0 : i32
    return %c0_i32, %c0_i32_0, %c0_i32_1 : i32, i32, i32
  }
}

</mosaic_0001>

<llo_original>
// kernel: tpu_custom_call.1
$region0: #{tpu_custom_call.1}
  #allocation0 [shape = 'u32[]', space=smem, size = 0x4, offset = 0x4, fixed_abs, tag = 'smem constant byte address 0x4 - core index']
  #allocation1 [shape = 'u32[144,128]{1,0:T(1,128)}', space=vmem, size = 0x12000, scoped, tag = 'internal scratch']
  %s0 = inlined_call_operand.hbm [shape: f32[2,16], index: 0, kind: input, shape index: {}]
  %s1 = inlined_call_operand.hbm [shape: f32[16,16], index: 1, kind: input, shape index: {}]
  %s2 = inlined_call_operand.vmem [shape: f32[1,16], index: 2, kind: input, shape index: {}]
  %s3 = inlined_call_operand.hbm [shape: f32[4,16,128], index: 3, kind: input, shape index: {}]
  %s4 = inlined_call_operand.vmem [shape: f32[4,1,128], index: 4, kind: input, shape index: {}]
  %s5 = inlined_call_operand.hbm [shape: f32[4,128,128], index: 5, kind: input, shape index: {}]
  %s6 = inlined_call_operand.vmem [shape: f32[4,1,128], index: 6, kind: input, shape index: {}]
  %s7 = inlined_call_operand.hbm [shape: f32[4,2,128], index: 7, kind: output, shape index: {}]
  %s8 = sld [smem:[#allocation0]]
  $region54: #{tpu_custom_call.1} parent=0
    _
  %s10 = ssub.s32 1, %s8
  %s11 = scalar_select 0, %s10, %s8
  $region1: #{tpu_custom_call.1} parent=0
    #allocation2 [shape = 'u8[1024]{0}', space=vmem, size = 0x400, scoped, tag = 'input window, operand 0, single buffered']
    #allocation3 [shape = 's32[1]{0}', space=sflag, size = 0x4, scoped, tag = 'scoped memory for tpu_custom_call.1']
    #allocation4 [shape = 's32[1]{0}', space=sflag, size = 0x4, scoped, tag = 'scoped memory for tpu_custom_call.1']
    #allocation5 [shape = 'u8[8192]{0}', space=vmem, size = 0x2000, scoped, tag = 'input window, operand 1, single buffered']
    #allocation6 [shape = 's32[1]{0}', space=sflag, size = 0x4, scoped, tag = 'scoped memory for tpu_custom_call.1']
    #allocation7 [shape = 'u8[32768]{0}', space=vmem, size = 0x8000, scoped, tag = 'input window, operand 3, single buffered']
    #allocation8 [shape = 'u8[262144]{0}', space=vmem, size = 0x40000, scoped, tag = 'input window, operand 5, single buffered']
    #allocation9 [shape = 's32[1]{0}', space=sflag, size = 0x4, scoped, tag = 'scoped memory for tpu_custom_call.1']
    #allocation10 [shape = 'u8[4096]{0}', space=vmem, size = 0x1000, scoped, tag = 'output window, operand 0, single buffered']
    %12 = vsyncpa [#allocation3], 0
    %13 = vsyncpa [#allocation6], 0
    %14 = vsyncpa [#allocation9], 0
    %15 = vsyncpa [#allocation4], 0
    // Predicated region
    $region2: #{tpu_custom_call.1} parent=1 // pred_check
      _
    $region3: #{tpu_custom_call.1} parent=1 // pred_check_branch
      %17 = sbr.rel (0) target = $region5
    $region4: #{tpu_custom_call.1} parent=1 // pred_region
      %s19 = ssub.s32 32, 32
      %20 = vsyncadd [#allocation3], %s19
      %s22 = sshll.u32 [#allocation2], 4
      %s23 = int_to_ptr.vmem [resolvable:$true] %s22
      %25 = dma.hbm_to_vmem [thread:$0]  %s0, 32, %s23, [#allocation3]
    $region5: #{tpu_custom_call.1} parent=1 // pred_fallthru
      _
    // Predicated region
    $region6: #{tpu_custom_call.1} parent=1 // pred_check
      _
    $region7: #{tpu_custom_call.1} parent=1 // pred_check_branch
      %27 = sbr.rel (0) target = $region9
    $region8: #{tpu_custom_call.1} parent=1 // pred_region
      %s29 = ssub.s32 256, 256
      %30 = vsyncadd [#allocation6], %s29
      %s31 = sshll.u32 [#allocation5], 4
      %s32 = int_to_ptr.vmem [resolvable:$true] %s31
      %37 = dma.hbm_to_vmem [thread:$0]  %s1, 256, %s32, [#allocation6], 128, 128, 8
    $region9: #{tpu_custom_call.1} parent=1 // pred_fallthru
      _
    // Predicated region
    $region10: #{tpu_custom_call.1} parent=1 // pred_check
      _
    $region11: #{tpu_custom_call.1} parent=1 // pred_check_branch
      %39 = sbr.rel (0) target = $region13
    $region12: #{tpu_custom_call.1} parent=1 // pred_region
      _
    $region13: #{tpu_custom_call.1} parent=1 // pred_fallthru
      _
    // Predicated region
    $region14: #{tpu_custom_call.1} parent=1 // pred_check
      _
    $region15: #{tpu_custom_call.1} parent=1 // pred_check_branch
      %41 = sbr.rel (0) target = $region17
    $region16: #{tpu_custom_call.1} parent=1 // pred_region
      %s43 = ssub.s32 1024, 1024
      %44 = vsyncadd [#allocation6], %s43
      %s45 = sshll.u32 [#allocation7], 4
      %s46 = int_to_ptr.vmem [resolvable:$true] %s45
      %51 = dma.hbm_to_vmem [thread:$0]  %s3, 1024, %s46, [#allocation6], 128, 128, 8
    $region17: #{tpu_custom_call.1} parent=1 // pred_fallthru
      _
    // Predicated region
    $region18: #{tpu_custom_call.1} parent=1 // pred_check
      _
    $region19: #{tpu_custom_call.1} parent=1 // pred_check_branch
      %53 = sbr.rel (0) target = $region21
    $region20: #{tpu_custom_call.1} parent=1 // pred_region
      _
    $region21: #{tpu_custom_call.1} parent=1 // pred_fallthru
      _
    // Predicated region
    $region22: #{tpu_custom_call.1} parent=1 // pred_check
      _
    $region23: #{tpu_custom_call.1} parent=1 // pred_check_branch
      %55 = sbr.rel (0) target = $region25
    $region24: #{tpu_custom_call.1} parent=1 // pred_region
      %s57 = ssub.s32 8192, 8192
      %58 = vsyncadd [#allocation9], %s57
      %s59 = sshll.u32 [#allocation8], 4
      %s60 = int_to_ptr.vmem [resolvable:$true] %s59
      %65 = dma.hbm_to_vmem [thread:$0]  %s5, 8192, %s60, [#allocation9], 128, 128, 8
    $region25: #{tpu_custom_call.1} parent=1 // pred_fallthru
      _
    // Predicated region
    $region26: #{tpu_custom_call.1} parent=1 // pred_check
      _
    $region27: #{tpu_custom_call.1} parent=1 // pred_check_branch
      %67 = sbr.rel (0) target = $region29
    $region28: #{tpu_custom_call.1} parent=1 // pred_region
      _
    $region29: #{tpu_custom_call.1} parent=1 // pred_fallthru
      _
    // Predicated region
    $region30: #{tpu_custom_call.1} parent=1 // pred_check
      _
    $region31: #{tpu_custom_call.1} parent=1 // pred_check_branch
      %69 = sbr.rel (0) target = $region33
    $region32: #{tpu_custom_call.1} parent=1 // pred_region
      %70 = dma.done [#allocation3], 32
    $region33: #{tpu_custom_call.1} parent=1 // pred_fallthru
      _
    // Predicated region
    $region34: #{tpu_custom_call.1} parent=1 // pred_check
      _
    $region35: #{tpu_custom_call.1} parent=1 // pred_check_branch
      %72 = sbr.rel (0) target = $region37
    $region36: #{tpu_custom_call.1} parent=1 // pred_region
      %73 = dma.done [#allocation6], 256
    $region37: #{tpu_custom_call.1} parent=1 // pred_fallthru
      _
    // Predicated region
    $region38: #{tpu_custom_call.1} parent=1 // pred_check
      _
    $region39: #{tpu_custom_call.1} parent=1 // pred_check_branch
      %75 = sbr.rel (0) target = $region41
    $region40: #{tpu_custom_call.1} parent=1 // pred_region
      %76 = dma.done [#allocation6], 1024
    $region41: #{tpu_custom_call.1} parent=1 // pred_fallthru
      _
    // Predicated region
    $region42: #{tpu_custom_call.1} parent=1 // pred_check
      _
    $region43: #{tpu_custom_call.1} parent=1 // pred_check_branch
      %78 = sbr.rel (0) target = $region45
    $region44: #{tpu_custom_call.1} parent=1 // pred_region
      %79 = dma.done [#allocation9], 8192
    $region45: #{tpu_custom_call.1} parent=1 // pred_fallthru
      _
    %v80 = vld [vmem:[#allocation2] sm:$0x3]
    %v81 = vld [vmem:[#allocation5] sm:$0xff]
    %v82 = vld [vmem:[#allocation5 + $0x8] sm:$0xff]
    %v83 = vld [vmem:[%s2] sm:$0x1]
    %v85 = vlaneseq
    %v86 = vshrl.u32 %v85, 7
    %v87 = vsub.s32 0, %v86
    %v88 = vrot.slane %v83, %v87
    %vm90 = vcmask 130048
    %v92 = vsel %vm90, %v80, 0
    %94 = vmatprep.subr.mxu0 0.0
    %95 = vmatpush1.msra.mxu0 %v81
    %96 = vmatprep.subr.mxu0 0.0
    %97 = vmatpush1.msra.mxu0 %v82
    %98 = vmatprep.subr.mxu0 0.0
    %99 = vmatpush1.msra.mxu0 0.0
    %100 = vmatprep.subr.mxu0 0.0
    %101 = vmatpush1.msra.mxu0 0.0
    %102 = vmatprep.subr.mxu0 0.0
    %103 = vmatpush1.msra.mxu0 0.0
    %104 = vmatprep.subr.mxu0 0.0
    %105 = vmatpush1.msra.mxu0 0.0
    %106 = vmatprep.subr.mxu0 0.0
    %107 = vmatpush1.msra.mxu0 0.0
    %108 = vmatprep.subr.mxu0 0.0
    %109 = vmatpush1.msra.mxu0 0.0
    %110 = vmatprep.subr.mxu0 0.0
    %111 = vmatpush1.msra.mxu0 0.0
    %112 = vmatprep.subr.mxu0 0.0
    %113 = vmatpush1.msra.mxu0 0.0
    %114 = vmatprep.subr.mxu0 0.0
    %115 = vmatpush1.msra.mxu0 0.0
    %116 = vmatprep.subr.mxu0 0.0
    %117 = vmatpush1.msra.mxu0 0.0
    %118 = vmatprep.subr.mxu0 0.0
    %119 = vmatpush1.msra.mxu0 0.0
    %120 = vmatprep.subr.mxu0 0.0
    %121 = vmatpush1.msra.mxu0 0.0
    %122 = vmatprep.subr.mxu0 0.0
    %123 = vmatpush1.msra.mxu0 0.0
    %124 = vmatprep.subr.mxu0 0.0
    %125 = vmatpush1.msra.mxu0 0.0
    %126 = vmatprep.subr.mxu0 0.0
    %127 = vmatpush1.msra.mxu0 0.0
    %128 = vmatprep.subr.mxu0 0.0
    %129 = vmatpush1.msra.mxu0 0.0
    %130 = vmatprep.subr.mxu0 0.0
    %131 = vmatpush1.msra.mxu0 0.0
    %132 = vmatprep.subr.mxu0 0.0
    %133 = vmatpush1.msra.mxu0 0.0
    %134 = vmatprep.subr.mxu0 0.0
    %135 = vmatpush1.msra.mxu0 0.0
    %136 = vmatprep.subr.mxu0 0.0
    %137 = vmatpush1.msra.mxu0 0.0
    %138 = vmatprep.subr.mxu0 0.0
    %139 = vmatpush1.msra.mxu0 0.0
    %140 = vmatprep.subr.mxu0 0.0
    %141 = vmatpush1.msra.mxu0 0.0
    %142 = vmatprep.subr.mxu0 0.0
    %143 = vmatpush1.msra.mxu0 0.0
    %144 = vmatprep.subr.mxu0 0.0
    %145 = vmatpush1.msra.mxu0 0.0
    %146 = vmatprep.subr.mxu0 0.0
    %147 = vmatpush1.msra.mxu0 0.0
    %148 = vmatprep.subr.mxu0 0.0
    %149 = vmatpush1.msra.mxu0 0.0
    %150 = vmatprep.subr.mxu0 0.0
    %151 = vmatpush1.msra.mxu0 0.0
    %152 = vmatprep.subr.mxu0 0.0
    %153 = vmatpush1.msra.mxu0 0.0
    %154 = vmatprep.subr.mxu0 0.0
    %155 = vmatpush1.msra.mxu0 0.0
    %156 = vmatprep.subr.mxu0 0.0
    %157 = vmatpush1.msra.mxu0 0.0
    %158 = vmatprep.mubr.f32.mxu0 0.0
    %159 = vmatmul.mubr.f32.gmra.mrb[0].mxu0 %v92
    %v160 = vpop.f32.mrb[0].mxu0
    %v161 = vadd.f32 %v88, %v160
    %v162 = vpop.f32.mrb[0].mxu0
    %163 = vdwg.mxu0
    %v164 = vld [vmem:[#allocation7] sm:$0xff]
    %v165 = vld [vmem:[#allocation7 + $0x8] sm:$0xff]
    %v166 = vld [vmem:[%s4] sm:$0x1]
    %v168 = vlaneseq
    %v169 = vshrl.u32 %v168, 7
    %v170 = vsub.s32 0, %v169
    %v171 = vrot.slane %v166, %v170
    %v174 = vsel %vm90, %v161, 0
    %176 = vmatprep.subr.mxu0 0.0
    %177 = vmatpush1.msra.mxu0 %v164
    %178 = vmatprep.subr.mxu0 0.0
    %179 = vmatpush1.msra.mxu0 %v165
    %180 = vmatprep.subr.mxu0 0.0
    %181 = vmatpush1.msra.mxu0 0.0
    %182 = vmatprep.subr.mxu0 0.0
    %183 = vmatpush1.msra.mxu0 0.0
    %184 = vmatprep.subr.mxu0 0.0
    %185 = vmatpush1.msra.mxu0 0.0
    %186 = vmatprep.subr.mxu0 0.0
    %187 = vmatpush1.msra.mxu0 0.0
    %188 = vmatprep.subr.mxu0 0.0
    %189 = vmatpush1.msra.mxu0 0.0
    %190 = vmatprep.subr.mxu0 0.0
    %191 = vmatpush1.msra.mxu0 0.0
    %192 = vmatprep.subr.mxu0 0.0
    %193 = vmatpush1.msra.mxu0 0.0
    %194 = vmatprep.subr.mxu0 0.0
    %195 = vmatpush1.msra.mxu0 0.0
    %196 = vmatprep.subr.mxu0 0.0
    %197 = vmatpush1.msra.mxu0 0.0
    %198 = vmatprep.subr.mxu0 0.0
    %199 = vmatpush1.msra.mxu0 0.0
    %200 = vmatprep.subr.mxu0 0.0
    %201 = vmatpush1.msra.mxu0 0.0
    %202 = vmatprep.subr.mxu0 0.0
    %203 = vmatpush1.msra.mxu0 0.0
    %204 = vmatprep.subr.mxu0 0.0
    %205 = vmatpush1.msra.mxu0 0.0
    %206 = vmatprep.subr.mxu0 0.0
    %207 = vmatpush1.msra.mxu0 0.0
    %208 = vmatprep.subr.mxu0 0.0
    %209 = vmatpush1.msra.mxu0 0.0
    %210 = vmatprep.subr.mxu0 0.0
    %211 = vmatpush1.msra.mxu0 0.0
    %212 = vmatprep.subr.mxu0 0.0
    %213 = vmatpush1.msra.mxu0 0.0
    %214 = vmatprep.subr.mxu0 0.0
    %215 = vmatpush1.msra.mxu0 0.0
    %216 = vmatprep.subr.mxu0 0.0
    %217 = vmatpush1.msra.mxu0 0.0
    %218 = vmatprep.subr.mxu0 0.0
    %219 = vmatpush1.msra.mxu0 0.0
    %220 = vmatprep.subr.mxu0 0.0
    %221 = vmatpush1.msra.mxu0 0.0
    %222 = vmatprep.subr.mxu0 0.0
    %223 = vmatpush1.msra.mxu0 0.0
    %224 = vmatprep.subr.mxu0 0.0
    %225 = vmatpush1.msra.mxu0 0.0
    %226 = vmatprep.subr.mxu0 0.0
    %227 = vmatpush1.msra.mxu0 0.0
    %228 = vmatprep.subr.mxu0 0.0
    %229 = vmatpush1.msra.mxu0 0.0
    %230 = vmatprep.subr.mxu0 0.0
    %231 = vmatpush1.msra.mxu0 0.0
    %232 = vmatprep.subr.mxu0 0.0
    %233 = vmatpush1.msra.mxu0 0.0
    %234 = vmatprep.subr.mxu0 0.0
    %235 = vmatpush1.msra.mxu0 0.0
    %236 = vmatprep.subr.mxu0 0.0
    %237 = vmatpush1.msra.mxu0 0.0
    %238 = vmatprep.subr.mxu0 0.0
    %239 = vmatpush1.msra.mxu0 0.0
    %240 = vmatprep.mubr.f32.mxu0 0.0
    %241 = vmatmul.mubr.f32.gmra.mrb[0].mxu0 %v174
    %v242 = vpop.f32.mrb[0].mxu0
    %v243 = vadd.f32 %v171, %v242
    %v244 = vpop.f32.mrb[0].mxu0
    %245 = vdwg.mxu0
    %v246 = vxor.u32 %v243, 2147483648
    %v247 = vmul.f32 %v246, 1.442695
    %v248 = vpow.pop %v247
    %v249 = vadd.f32 %v248, 1.0
    %v250 = vrcp.pop %v249
    %v251 = vmul.f32 1.0, %v250
    %v252 = vmul.f32 %v243, %v251
    %v253 = vld [vmem:[#allocation8] sm:$0xff]
    %v254 = vld [vmem:[#allocation8 + $0x8] sm:$0xff]
    %v255 = vld [vmem:[#allocation8 + $0x10] sm:$0xff]
    %v256 = vld [vmem:[#allocation8 + $0x18] sm:$0xff]
    %v257 = vld [vmem:[#allocation8 + $0x20] sm:$0xff]
    %v258 = vld [vmem:[#allocation8 + $0x28] sm:$0xff]
    %v259 = vld [vmem:[#allocation8 + $0x30] sm:$0xff]
    %v260 = vld [vmem:[#allocation8 + $0x38] sm:$0xff]
    %v261 = vld [vmem:[#allocation8 + $0x40] sm:$0xff]
    %v262 = vld [vmem:[#allocation8 + $0x48] sm:$0xff]
    %v263 = vld [vmem:[#allocation8 + $0x50] sm:$0xff]
    %v264 = vld [vmem:[#allocation8 + $0x58] sm:$0xff]
    %v265 = vld [vmem:[#allocation8 + $0x60] sm:$0xff]
    %v266 = vld [vmem:[#allocation8 + $0x68] sm:$0xff]
    %v267 = vld [vmem:[#allocation8 + $0x70] sm:$0xff]
    %v268 = vld [vmem:[#allocation8 + $0x78] sm:$0xff]
    %v269 = vld [vmem:[%s6] sm:$0x1]
    %v271 = vlaneseq
    %v272 = vshrl.u32 %v271, 7
    %v273 = vsub.s32 0, %v272
    %v274 = vrot.slane %v269, %v273
    %276 = vmatprep.subr.mxu0 0.0
    %277 = vmatpush1.msra.mxu0 %v253
    %278 = vmatprep.subr.mxu0 0.0
    %279 = vmatpush1.msra.mxu0 %v254
    %280 = vmatprep.subr.mxu0 0.0
    %281 = vmatpush1.msra.mxu0 %v255
    %282 = vmatprep.subr.mxu0 0.0
    %283 = vmatpush1.msra.mxu0 %v256
    %284 = vmatprep.subr.mxu0 0.0
    %285 = vmatpush1.msra.mxu0 %v257
    %286 = vmatprep.subr.mxu0 0.0
    %287 = vmatpush1.msra.mxu0 %v258
    %288 = vmatprep.subr.mxu0 0.0
    %289 = vmatpush1.msra.mxu0 %v259
    %290 = vmatprep.subr.mxu0 0.0
    %291 = vmatpush1.msra.mxu0 %v260
    %292 = vmatprep.subr.mxu0 0.0
    %293 = vmatpush1.msra.mxu0 %v261
    %294 = vmatprep.subr.mxu0 0.0
    %295 = vmatpush1.msra.mxu0 %v262
    %296 = vmatprep.subr.mxu0 0.0
    %297 = vmatpush1.msra.mxu0 %v263
    %298 = vmatprep.subr.mxu0 0.0
    %299 = vmatpush1.msra.mxu0 %v264
    %300 = vmatprep.subr.mxu0 0.0
    %301 = vmatpush1.msra.mxu0 %v265
    %302 = vmatprep.subr.mxu0 0.0
    %303 = vmatpush1.msra.mxu0 %v266
    %304 = vmatprep.subr.mxu0 0.0
    %305 = vmatpush1.msra.mxu0 %v267
    %306 = vmatprep.subr.mxu0 0.0
    %307 = vmatpush1.msra.mxu0 %v268
    %308 = vmatprep.subr.mxu0 0.0
    %309 = vmatpush1.msra.mxu0 0.0
    %310 = vmatprep.subr.mxu0 0.0
    %311 = vmatpush1.msra.mxu0 0.0
    %312 = vmatprep.subr.mxu0 0.0
    %313 = vmatpush1.msra.mxu0 0.0
    %314 = vmatprep.subr.mxu0 0.0
    %315 = vmatpush1.msra.mxu0 0.0
    %316 = vmatprep.subr.mxu0 0.0
    %317 = vmatpush1.msra.mxu0 0.0
    %318 = vmatprep.subr.mxu0 0.0
    %319 = vmatpush1.msra.mxu0 0.0
    %320 = vmatprep.subr.mxu0 0.0
    %321 = vmatpush1.msra.mxu0 0.0
    %322 = vmatprep.subr.mxu0 0.0
    %323 = vmatpush1.msra.mxu0 0.0
    %324 = vmatprep.subr.mxu0 0.0
    %325 = vmatpush1.msra.mxu0 0.0
    %326 = vmatprep.subr.mxu0 0.0
    %327 = vmatpush1.msra.mxu0 0.0
    %328 = vmatprep.subr.mxu0 0.0
    %329 = vmatpush1.msra.mxu0 0.0
    %330 = vmatprep.subr.mxu0 0.0
    %331 = vmatpush1.msra.mxu0 0.0
    %332 = vmatprep.subr.mxu0 0.0
    %333 = vmatpush1.msra.mxu0 0.0
    %334 = vmatprep.subr.mxu0 0.0
    %335 = vmatpush1.msra.mxu0 0.0
    %336 = vmatprep.subr.mxu0 0.0
    %337 = vmatpush1.msra.mxu0 0.0
    %338 = vmatprep.subr.mxu0 0.0
    %339 = vmatpush1.msra.mxu0 0.0
    %340 = vmatprep.mubr.f32.mxu0 0.0
    %341 = vmatmul.mubr.f32.gmra.mrb[0].mxu0 %v252
    %v342 = vpop.f32.mrb[0].mxu0
    %v343 = vadd.f32 %v274, %v342
    %v344 = vpop.f32.mrb[0].mxu0
    %345 = vdwg.mxu0
    %346 = vst [vmem:[#allocation10] sm:$0x3] %v343
    %s347 = scalar_lea.vmem [#allocation7], 16
    %v348 = vld [vmem:[%s347] sm:$0xff]
    %v349 = vld [vmem:[%s347 + $0x8] sm:$0xff]
    %s350 = scalar_lea.vmem %s4, 1
    %v351 = vld [vmem:[%s350] sm:$0x1]
    %v353 = vlaneseq
    %v354 = vshrl.u32 %v353, 7
    %v355 = vsub.s32 0, %v354
    %v356 = vrot.slane %v351, %v355
    %358 = vmatprep.subr.mxu0 0.0
    %359 = vmatpush1.msra.mxu0 %v348
    %360 = vmatprep.subr.mxu0 0.0
    %361 = vmatpush1.msra.mxu0 %v349
    %362 = vmatprep.subr.mxu0 0.0
    %363 = vmatpush1.msra.mxu0 0.0
    %364 = vmatprep.subr.mxu0 0.0
    %365 = vmatpush1.msra.mxu0 0.0
    %366 = vmatprep.subr.mxu0 0.0
    %367 = vmatpush1.msra.mxu0 0.0
    %368 = vmatprep.subr.mxu0 0.0
    %369 = vmatpush1.msra.mxu0 0.0
    %370 = vmatprep.subr.mxu0 0.0
    %371 = vmatpush1.msra.mxu0 0.0
    %372 = vmatprep.subr.mxu0 0.0
    %373 = vmatpush1.msra.mxu0 0.0
    %374 = vmatprep.subr.mxu0 0.0
    %375 = vmatpush1.msra.mxu0 0.0
    %376 = vmatprep.subr.mxu0 0.0
    %377 = vmatpush1.msra.mxu0 0.0
    %378 = vmatprep.subr.mxu0 0.0
    %379 = vmatpush1.msra.mxu0 0.0
    %380 = vmatprep.subr.mxu0 0.0
    %381 = vmatpush1.msra.mxu0 0.0
    %382 = vmatprep.subr.mxu0 0.0
    %383 = vmatpush1.msra.mxu0 0.0
    %384 = vmatprep.subr.mxu0 0.0
    %385 = vmatpush1.msra.mxu0 0.0
    %386 = vmatprep.subr.mxu0 0.0
    %387 = vmatpush1.msra.mxu0 0.0
    %388 = vmatprep.subr.mxu0 0.0
    %389 = vmatpush1.msra.mxu0 0.0
    %390 = vmatprep.subr.mxu0 0.0
    %391 = vmatpush1.msra.mxu0 0.0
    %392 = vmatprep.subr.mxu0 0.0
    %393 = vmatpush1.msra.mxu0 0.0
    %394 = vmatprep.subr.mxu0 0.0
    %395 = vmatpush1.msra.mxu0 0.0
    %396 = vmatprep.subr.mxu0 0.0
    %397 = vmatpush1.msra.mxu0 0.0
    %398 = vmatprep.subr.mxu0 0.0
    %399 = vmatpush1.msra.mxu0 0.0
    %400 = vmatprep.subr.mxu0 0.0
    %401 = vmatpush1.msra.mxu0 0.0
    %402 = vmatprep.subr.mxu0 0.0
    %403 = vmatpush1.msra.mxu0 0.0
    %404 = vmatprep.subr.mxu0 0.0
    %405 = vmatpush1.msra.mxu0 0.0
    %406 = vmatprep.subr.mxu0 0.0
    %407 = vmatpush1.msra.mxu0 0.0
    %408 = vmatprep.subr.mxu0 0.0
    %409 = vmatpush1.msra.mxu0 0.0
    %410 = vmatprep.subr.mxu0 0.0
    %411 = vmatpush1.msra.mxu0 0.0
    %412 = vmatprep.subr.mxu0 0.0
    %413 = vmatpush1.msra.mxu0 0.0
    %414 = vmatprep.subr.mxu0 0.0
    %415 = vmatpush1.msra.mxu0 0.0
    %416 = vmatprep.subr.mxu0 0.0
    %417 = vmatpush1.msra.mxu0 0.0
    %418 = vmatprep.subr.mxu0 0.0
    %419 = vmatpush1.msra.mxu0 0.0
    %420 = vmatprep.subr.mxu0 0.0
    %421 = vmatpush1.msra.mxu0 0.0
    %422 = vmatprep.mubr.f32.mxu0 0.0
    %423 = vmatmul.mubr.f32.gmra.mrb[0].mxu0 %v174
    %v424 = vpop.f32.mrb[0].mxu0
    %v425 = vadd.f32 %v356, %v424
    %v426 = vpop.f32.mrb[0].mxu0
    %427 = vdwg.mxu0
    %v428 = vxor.u32 %v425, 2147483648
    %v429 = vmul.f32 %v428, 1.442695
    %v430 = vpow.pop %v429
    %v431 = vadd.f32 %v430, 1.0
    %v432 = vrcp.pop %v431
    %v433 = vmul.f32 1.0, %v432
    %v434 = vmul.f32 %v425, %v433
    %s435 = scalar_lea.vmem [#allocation8], 128
    %v436 = vld [vmem:[%s435] sm:$0xff]
    %v437 = vld [vmem:[%s435 + $0x8] sm:$0xff]
    %v438 = vld [vmem:[%s435 + $0x10] sm:$0xff]
    %v439 = vld [vmem:[%s435 + $0x18] sm:$0xff]
    %v440 = vld [vmem:[%s435 + $0x20] sm:$0xff]
    %v441 = vld [vmem:[%s435 + $0x28] sm:$0xff]
    %v442 = vld [vmem:[%s435 + $0x30] sm:$0xff]
    %v443 = vld [vmem:[%s435 + $0x38] sm:$0xff]
    %v444 = vld [vmem:[%s435 + $0x40] sm:$0xff]
    %v445 = vld [vmem:[%s435 + $0x48] sm:$0xff]
    %v446 = vld [vmem:[%s435 + $0x50] sm:$0xff]
    %v447 = vld [vmem:[%s435 + $0x58] sm:$0xff]
    %v448 = vld [vmem:[%s435 + $0x60] sm:$0xff]
    %v449 = vld [vmem:[%s435 + $0x68] sm:$0xff]
    %v450 = vld [vmem:[%s435 + $0x70] sm:$0xff]
    %v451 = vld [vmem:[%s435 + $0x78] sm:$0xff]
    %s452 = scalar_lea.vmem %s6, 1
    %v453 = vld [vmem:[%s452] sm:$0x1]
    %v455 = vlaneseq
    %v456 = vshrl.u32 %v455, 7
    %v457 = vsub.s32 0, %v456
    %v458 = vrot.slane %v453, %v457
    %460 = vmatprep.subr.mxu0 0.0
    %461 = vmatpush1.msra.mxu0 %v436
    %462 = vmatprep.subr.mxu0 0.0
    %463 = vmatpush1.msra.mxu0 %v437
    %464 = vmatprep.subr.mxu0 0.0
    %465 = vmatpush1.msra.mxu0 %v438
    %466 = vmatprep.subr.mxu0 0.0
    %467 = vmatpush1.msra.mxu0 %v439
    %468 = vmatprep.subr.mxu0 0.0
    %469 = vmatpush1.msra.mxu0 %v440
    %470 = vmatprep.subr.mxu0 0.0
    %471 = vmatpush1.msra.mxu0 %v441
    %472 = vmatprep.subr.mxu0 0.0
    %473 = vmatpush1.msra.mxu0 %v442
    %474 = vmatprep.subr.mxu0 0.0
    %475 = vmatpush1.msra.mxu0 %v443
    %476 = vmatprep.subr.mxu0 0.0
    %477 = vmatpush1.msra.mxu0 %v444
    %478 = vmatprep.subr.mxu0 0.0
    %479 = vmatpush1.msra.mxu0 %v445
    %480 = vmatprep.subr.mxu0 0.0
    %481 = vmatpush1.msra.mxu0 %v446
    %482 = vmatprep.subr.mxu0 0.0
    %483 = vmatpush1.msra.mxu0 %v447
    %484 = vmatprep.subr.mxu0 0.0
    %485 = vmatpush1.msra.mxu0 %v448
    %486 = vmatprep.subr.mxu0 0.0
    %487 = vmatpush1.msra.mxu0 %v449
    %488 = vmatprep.subr.mxu0 0.0
    %489 = vmatpush1.msra.mxu0 %v450
    %490 = vmatprep.subr.mxu0 0.0
    %491 = vmatpush1.msra.mxu0 %v451
    %492 = vmatprep.subr.mxu0 0.0
    %493 = vmatpush1.msra.mxu0 0.0
    %494 = vmatprep.subr.mxu0 0.0
    %495 = vmatpush1.msra.mxu0 0.0
    %496 = vmatprep.subr.mxu0 0.0
    %497 = vmatpush1.msra.mxu0 0.0
    %498 = vmatprep.subr.mxu0 0.0
    %499 = vmatpush1.msra.mxu0 0.0
    %500 = vmatprep.subr.mxu0 0.0
    %501 = vmatpush1.msra.mxu0 0.0
    %502 = vmatprep.subr.mxu0 0.0
    %503 = vmatpush1.msra.mxu0 0.0
    %504 = vmatprep.subr.mxu0 0.0
    %505 = vmatpush1.msra.mxu0 0.0
    %506 = vmatprep.subr.mxu0 0.0
    %507 = vmatpush1.msra.mxu0 0.0
    %508 = vmatprep.subr.mxu0 0.0
    %509 = vmatpush1.msra.mxu0 0.0
    %510 = vmatprep.subr.mxu0 0.0
    %511 = vmatpush1.msra.mxu0 0.0
    %512 = vmatprep.subr.mxu0 0.0
    %513 = vmatpush1.msra.mxu0 0.0
    %514 = vmatprep.subr.mxu0 0.0
    %515 = vmatpush1.msra.mxu0 0.0
    %516 = vmatprep.subr.mxu0 0.0
    %517 = vmatpush1.msra.mxu0 0.0
    %518 = vmatprep.subr.mxu0 0.0
    %519 = vmatpush1.msra.mxu0 0.0
    %520 = vmatprep.subr.mxu0 0.0
    %521 = vmatpush1.msra.mxu0 0.0
    %522 = vmatprep.subr.mxu0 0.0
    %523 = vmatpush1.msra.mxu0 0.0
    %524 = vmatprep.mubr.f32.mxu0 0.0
    %525 = vmatmul.mubr.f32.gmra.mrb[0].mxu0 %v434
    %v526 = vpop.f32.mrb[0].mxu0
    %v527 = vadd.f32 %v458, %v526
    %v528 = vpop.f32.mrb[0].mxu0
    %529 = vdwg.mxu0
    %s530 = scalar_lea.vmem [#allocation10], 2
    %531 = vst [vmem:[%s530] sm:$0x3] %v527
    %s532 = scalar_lea.vmem [#allocation7], 32
    %v533 = vld [vmem:[%s532] sm:$0xff]
    %v534 = vld [vmem:[%s532 + $0x8] sm:$0xff]
    %s535 = scalar_lea.vmem %s4, 2
    %v536 = vld [vmem:[%s535] sm:$0x1]
    %v538 = vlaneseq
    %v539 = vshrl.u32 %v538, 7
    %v540 = vsub.s32 0, %v539
    %v541 = vrot.slane %v536, %v540
    %543 = vmatprep.subr.mxu0 0.0
    %544 = vmatpush1.msra.mxu0 %v533
    %545 = vmatprep.subr.mxu0 0.0
    %546 = vmatpush1.msra.mxu0 %v534
    %547 = vmatprep.subr.mxu0 0.0
    %548 = vmatpush1.msra.mxu0 0.0
    %549 = vmatprep.subr.mxu0 0.0
    %550 = vmatpush1.msra.mxu0 0.0
    %551 = vmatprep.subr.mxu0 0.0
    %552 = vmatpush1.msra.mxu0 0.0
    %553 = vmatprep.subr.mxu0 0.0
    %554 = vmatpush1.msra.mxu0 0.0
    %555 = vmatprep.subr.mxu0 0.0
    %556 = vmatpush1.msra.mxu0 0.0
    %557 = vmatprep.subr.mxu0 0.0
    %558 = vmatpush1.msra.mxu0 0.0
    %559 = vmatprep.subr.mxu0 0.0
    %560 = vmatpush1.msra.mxu0 0.0
    %561 = vmatprep.subr.mxu0 0.0
    %562 = vmatpush1.msra.mxu0 0.0
    %563 = vmatprep.subr.mxu0 0.0
    %564 = vmatpush1.msra.mxu0 0.0
    %565 = vmatprep.subr.mxu0 0.0
    %566 = vmatpush1.msra.mxu0 0.0
    %567 = vmatprep.subr.mxu0 0.0
    %568 = vmatpush1.msra.mxu0 0.0
    %569 = vmatprep.subr.mxu0 0.0
    %570 = vmatpush1.msra.mxu0 0.0
    %571 = vmatprep.subr.mxu0 0.0
    %572 = vmatpush1.msra.mxu0 0.0
    %573 = vmatprep.subr.mxu0 0.0
    %574 = vmatpush1.msra.mxu0 0.0
    %575 = vmatprep.subr.mxu0 0.0
    %576 = vmatpush1.msra.mxu0 0.0
    %577 = vmatprep.subr.mxu0 0.0
    %578 = vmatpush1.msra.mxu0 0.0
    %579 = vmatprep.subr.mxu0 0.0
    %580 = vmatpush1.msra.mxu0 0.0
    %581 = vmatprep.subr.mxu0 0.0
    %582 = vmatpush1.msra.mxu0 0.0
    %583 = vmatprep.subr.mxu0 0.0
    %584 = vmatpush1.msra.mxu0 0.0
    %585 = vmatprep.subr.mxu0 0.0
    %586 = vmatpush1.msra.mxu0 0.0
    %587 = vmatprep.subr.mxu0 0.0
    %588 = vmatpush1.msra.mxu0 0.0
    %589 = vmatprep.subr.mxu0 0.0
    %590 = vmatpush1.msra.mxu0 0.0
    %591 = vmatprep.subr.mxu0 0.0
    %592 = vmatpush1.msra.mxu0 0.0
    %593 = vmatprep.subr.mxu0 0.0
    %594 = vmatpush1.msra.mxu0 0.0
    %595 = vmatprep.subr.mxu0 0.0
    %596 = vmatpush1.msra.mxu0 0.0
    %597 = vmatprep.subr.mxu0 0.0
    %598 = vmatpush1.msra.mxu0 0.0
    %599 = vmatprep.subr.mxu0 0.0
    %600 = vmatpush1.msra.mxu0 0.0
    %601 = vmatprep.subr.mxu0 0.0
    %602 = vmatpush1.msra.mxu0 0.0
    %603 = vmatprep.subr.mxu0 0.0
    %604 = vmatpush1.msra.mxu0 0.0
    %605 = vmatprep.subr.mxu0 0.0
    %606 = vmatpush1.msra.mxu0 0.0
    %607 = vmatprep.mubr.f32.mxu0 0.0
    %608 = vmatmul.mubr.f32.gmra.mrb[0].mxu0 %v174
    %v609 = vpop.f32.mrb[0].mxu0
    %v610 = vadd.f32 %v541, %v609
    %v611 = vpop.f32.mrb[0].mxu0
    %612 = vdwg.mxu0
    %v613 = vxor.u32 %v610, 2147483648
    %v614 = vmul.f32 %v613, 1.442695
    %v615 = vpow.pop %v614
    %v616 = vadd.f32 %v615, 1.0
    %v617 = vrcp.pop %v616
    %v618 = vmul.f32 1.0, %v617
    %v619 = vmul.f32 %v610, %v618
    %s620 = scalar_lea.vmem [#allocation8], 256
    %v621 = vld [vmem:[%s620] sm:$0xff]
    %v622 = vld [vmem:[%s620 + $0x8] sm:$0xff]
    %v623 = vld [vmem:[%s620 + $0x10] sm:$0xff]
    %v624 = vld [vmem:[%s620 + $0x18] sm:$0xff]
    %v625 = vld [vmem:[%s620 + $0x20] sm:$0xff]
    %v626 = vld [vmem:[%s620 + $0x28] sm:$0xff]
    %v627 = vld [vmem:[%s620 + $0x30] sm:$0xff]
    %v628 = vld [vmem:[%s620 + $0x38] sm:$0xff]
    %v629 = vld [vmem:[%s620 + $0x40] sm:$0xff]
    %v630 = vld [vmem:[%s620 + $0x48] sm:$0xff]
    %v631 = vld [vmem:[%s620 + $0x50] sm:$0xff]
    %v632 = vld [vmem:[%s620 + $0x58] sm:$0xff]
    %v633 = vld [vmem:[%s620 + $0x60] sm:$0xff]
    %v634 = vld [vmem:[%s620 + $0x68] sm:$0xff]
    %v635 = vld [vmem:[%s620 + $0x70] sm:$0xff]
    %v636 = vld [vmem:[%s620 + $0x78] sm:$0xff]
    %s637 = scalar_lea.vmem %s6, 2
    %v638 = vld [vmem:[%s637] sm:$0x1]
    %v640 = vlaneseq
    %v641 = vshrl.u32 %v640, 7
    %v642 = vsub.s32 0, %v641
    %v643 = vrot.slane %v638, %v642
    %645 = vmatprep.subr.mxu0 0.0
    %646 = vmatpush1.msra.mxu0 %v621
    %647 = vmatprep.subr.mxu0 0.0
    %648 = vmatpush1.msra.mxu0 %v622
    %649 = vmatprep.subr.mxu0 0.0
    %650 = vmatpush1.msra.mxu0 %v623
    %651 = vmatprep.subr.mxu0 0.0
    %652 = vmatpush1.msra.mxu0 %v624
    %653 = vmatprep.subr.mxu0 0.0
    %654 = vmatpush1.msra.mxu0 %v625
    %655 = vmatprep.subr.mxu0 0.0
    %656 = vmatpush1.msra.mxu0 %v626
    %657 = vmatprep.subr.mxu0 0.0
    %658 = vmatpush1.msra.mxu0 %v627
    %659 = vmatprep.subr.mxu0 0.0
    %660 = vmatpush1.msra.mxu0 %v628
    %661 = vmatprep.subr.mxu0 0.0
    %662 = vmatpush1.msra.mxu0 %v629
    %663 = vmatprep.subr.mxu0 0.0
    %664 = vmatpush1.msra.mxu0 %v630
    %665 = vmatprep.subr.mxu0 0.0
    %666 = vmatpush1.msra.mxu0 %v631
    %667 = vmatprep.subr.mxu0 0.0
    %668 = vmatpush1.msra.mxu0 %v632
    %669 = vmatprep.subr.mxu0 0.0
    %670 = vmatpush1.msra.mxu0 %v633
    %671 = vmatprep.subr.mxu0 0.0
    %672 = vmatpush1.msra.mxu0 %v634
    %673 = vmatprep.subr.mxu0 0.0
    %674 = vmatpush1.msra.mxu0 %v635
    %675 = vmatprep.subr.mxu0 0.0
    %676 = vmatpush1.msra.mxu0 %v636
    %677 = vmatprep.subr.mxu0 0.0
    %678 = vmatpush1.msra.mxu0 0.0
    %679 = vmatprep.subr.mxu0 0.0
    %680 = vmatpush1.msra.mxu0 0.0
    %681 = vmatprep.subr.mxu0 0.0
    %682 = vmatpush1.msra.mxu0 0.0
    %683 = vmatprep.subr.mxu0 0.0
    %684 = vmatpush1.msra.mxu0 0.0
    %685 = vmatprep.subr.mxu0 0.0
    %686 = vmatpush1.msra.mxu0 0.0
    %687 = vmatprep.subr.mxu0 0.0
    %688 = vmatpush1.msra.mxu0 0.0
    %689 = vmatprep.subr.mxu0 0.0
    %690 = vmatpush1.msra.mxu0 0.0
    %691 = vmatprep.subr.mxu0 0.0
    %692 = vmatpush1.msra.mxu0 0.0
    %693 = vmatprep.subr.mxu0 0.0
    %694 = vmatpush1.msra.mxu0 0.0
    %695 = vmatprep.subr.mxu0 0.0
    %696 = vmatpush1.msra.mxu0 0.0
    %697 = vmatprep.subr.mxu0 0.0
    %698 = vmatpush1.msra.mxu0 0.0
    %699 = vmatprep.subr.mxu0 0.0
    %700 = vmatpush1.msra.mxu0 0.0
    %701 = vmatprep.subr.mxu0 0.0
    %702 = vmatpush1.msra.mxu0 0.0
    %703 = vmatprep.subr.mxu0 0.0
    %704 = vmatpush1.msra.mxu0 0.0
    %705 = vmatprep.subr.mxu0 0.0
    %706 = vmatpush1.msra.mxu0 0.0
    %707 = vmatprep.subr.mxu0 0.0
    %708 = vmatpush1.msra.mxu0 0.0
    %709 = vmatprep.mubr.f32.mxu0 0.0
    %710 = vmatmul.mubr.f32.gmra.mrb[0].mxu0 %v619
    %v711 = vpop.f32.mrb[0].mxu0
    %v712 = vadd.f32 %v643, %v711
    %v713 = vpop.f32.mrb[0].mxu0
    %714 = vdwg.mxu0
    %s715 = scalar_lea.vmem [#allocation10], 4
    %716 = vst [vmem:[%s715] sm:$0x3] %v712
    %s717 = scalar_lea.vmem [#allocation7], 48
    %v718 = vld [vmem:[%s717] sm:$0xff]
    %v719 = vld [vmem:[%s717 + $0x8] sm:$0xff]
    %s720 = scalar_lea.vmem %s4, 3
    %v721 = vld [vmem:[%s720] sm:$0x1]
    %v723 = vlaneseq
    %v724 = vshrl.u32 %v723, 7
    %v725 = vsub.s32 0, %v724
    %v726 = vrot.slane %v721, %v725
    %728 = vmatprep.subr.mxu0 0.0
    %729 = vmatpush1.msra.mxu0 %v718
    %730 = vmatprep.subr.mxu0 0.0
    %731 = vmatpush1.msra.mxu0 %v719
    %732 = vmatprep.subr.mxu0 0.0
    %733 = vmatpush1.msra.mxu0 0.0
    %734 = vmatprep.subr.mxu0 0.0
    %735 = vmatpush1.msra.mxu0 0.0
    %736 = vmatprep.subr.mxu0 0.0
    %737 = vmatpush1.msra.mxu0 0.0
    %738 = vmatprep.subr.mxu0 0.0
    %739 = vmatpush1.msra.mxu0 0.0
    %740 = vmatprep.subr.mxu0 0.0
    %741 = vmatpush1.msra.mxu0 0.0
    %742 = vmatprep.subr.mxu0 0.0
    %743 = vmatpush1.msra.mxu0 0.0
    %744 = vmatprep.subr.mxu0 0.0
    %745 = vmatpush1.msra.mxu0 0.0
    %746 = vmatprep.subr.mxu0 0.0
    %747 = vmatpush1.msra.mxu0 0.0
    %748 = vmatprep.subr.mxu0 0.0
    %749 = vmatpush1.msra.mxu0 0.0
    %750 = vmatprep.subr.mxu0 0.0
    %751 = vmatpush1.msra.mxu0 0.0
    %752 = vmatprep.subr.mxu0 0.0
    %753 = vmatpush1.msra.mxu0 0.0
    %754 = vmatprep.subr.mxu0 0.0
    %755 = vmatpush1.msra.mxu0 0.0
    %756 = vmatprep.subr.mxu0 0.0
    %757 = vmatpush1.msra.mxu0 0.0
    %758 = vmatprep.subr.mxu0 0.0
    %759 = vmatpush1.msra.mxu0 0.0
    %760 = vmatprep.subr.mxu0 0.0
    %761 = vmatpush1.msra.mxu0 0.0
    %762 = vmatprep.subr.mxu0 0.0
    %763 = vmatpush1.msra.mxu0 0.0
    %764 = vmatprep.subr.mxu0 0.0
    %765 = vmatpush1.msra.mxu0 0.0
    %766 = vmatprep.subr.mxu0 0.0
    %767 = vmatpush1.msra.mxu0 0.0
    %768 = vmatprep.subr.mxu0 0.0
    %769 = vmatpush1.msra.mxu0 0.0
    %770 = vmatprep.subr.mxu0 0.0
    %771 = vmatpush1.msra.mxu0 0.0
    %772 = vmatprep.subr.mxu0 0.0
    %773 = vmatpush1.msra.mxu0 0.0
    %774 = vmatprep.subr.mxu0 0.0
    %775 = vmatpush1.msra.mxu0 0.0
    %776 = vmatprep.subr.mxu0 0.0
    %777 = vmatpush1.msra.mxu0 0.0
    %778 = vmatprep.subr.mxu0 0.0
    %779 = vmatpush1.msra.mxu0 0.0
    %780 = vmatprep.subr.mxu0 0.0
    %781 = vmatpush1.msra.mxu0 0.0
    %782 = vmatprep.subr.mxu0 0.0
    %783 = vmatpush1.msra.mxu0 0.0
    %784 = vmatprep.subr.mxu0 0.0
    %785 = vmatpush1.msra.mxu0 0.0
    %786 = vmatprep.subr.mxu0 0.0
    %787 = vmatpush1.msra.mxu0 0.0
    %788 = vmatprep.subr.mxu0 0.0
    %789 = vmatpush1.msra.mxu0 0.0
    %790 = vmatprep.subr.mxu0 0.0
    %791 = vmatpush1.msra.mxu0 0.0
    %792 = vmatprep.mubr.f32.mxu0 0.0
    %793 = vmatmul.mubr.f32.gmra.mrb[0].mxu0 %v174
    %v794 = vpop.f32.mrb[0].mxu0
    %v795 = vadd.f32 %v726, %v794
    %v796 = vpop.f32.mrb[0].mxu0
    %797 = vdwg.mxu0
    %v798 = vxor.u32 %v795, 2147483648
    %v799 = vmul.f32 %v798, 1.442695
    %v800 = vpow.pop %v799
    %v801 = vadd.f32 %v800, 1.0
    %v802 = vrcp.pop %v801
    %v803 = vmul.f32 1.0, %v802
    %v804 = vmul.f32 %v795, %v803
    %s805 = scalar_lea.vmem [#allocation8], 384
    %v806 = vld [vmem:[%s805] sm:$0xff]
    %v807 = vld [vmem:[%s805 + $0x8] sm:$0xff]
    %v808 = vld [vmem:[%s805 + $0x10] sm:$0xff]
    %v809 = vld [vmem:[%s805 + $0x18] sm:$0xff]
    %v810 = vld [vmem:[%s805 + $0x20] sm:$0xff]
    %v811 = vld [vmem:[%s805 + $0x28] sm:$0xff]
    %v812 = vld [vmem:[%s805 + $0x30] sm:$0xff]
    %v813 = vld [vmem:[%s805 + $0x38] sm:$0xff]
    %v814 = vld [vmem:[%s805 + $0x40] sm:$0xff]
    %v815 = vld [vmem:[%s805 + $0x48] sm:$0xff]
    %v816 = vld [vmem:[%s805 + $0x50] sm:$0xff]
    %v817 = vld [vmem:[%s805 + $0x58] sm:$0xff]
    %v818 = vld [vmem:[%s805 + $0x60] sm:$0xff]
    %v819 = vld [vmem:[%s805 + $0x68] sm:$0xff]
    %v820 = vld [vmem:[%s805 + $0x70] sm:$0xff]
    %v821 = vld [vmem:[%s805 + $0x78] sm:$0xff]
    %s822 = scalar_lea.vmem %s6, 3
    %v823 = vld [vmem:[%s822] sm:$0x1]
    %v825 = vlaneseq
    %v826 = vshrl.u32 %v825, 7
    %v827 = vsub.s32 0, %v826
    %v828 = vrot.slane %v823, %v827
    %830 = vmatprep.subr.mxu0 0.0
    %831 = vmatpush1.msra.mxu0 %v806
    %832 = vmatprep.subr.mxu0 0.0
    %833 = vmatpush1.msra.mxu0 %v807
    %834 = vmatprep.subr.mxu0 0.0
    %835 = vmatpush1.msra.mxu0 %v808
    %836 = vmatprep.subr.mxu0 0.0
    %837 = vmatpush1.msra.mxu0 %v809
    %838 = vmatprep.subr.mxu0 0.0
    %839 = vmatpush1.msra.mxu0 %v810
    %840 = vmatprep.subr.mxu0 0.0
    %841 = vmatpush1.msra.mxu0 %v811
    %842 = vmatprep.subr.mxu0 0.0
    %843 = vmatpush1.msra.mxu0 %v812
    %844 = vmatprep.subr.mxu0 0.0
    %845 = vmatpush1.msra.mxu0 %v813
    %846 = vmatprep.subr.mxu0 0.0
    %847 = vmatpush1.msra.mxu0 %v814
    %848 = vmatprep.subr.mxu0 0.0
    %849 = vmatpush1.msra.mxu0 %v815
    %850 = vmatprep.subr.mxu0 0.0
    %851 = vmatpush1.msra.mxu0 %v816
    %852 = vmatprep.subr.mxu0 0.0
    %853 = vmatpush1.msra.mxu0 %v817
    %854 = vmatprep.subr.mxu0 0.0
    %855 = vmatpush1.msra.mxu0 %v818
    %856 = vmatprep.subr.mxu0 0.0
    %857 = vmatpush1.msra.mxu0 %v819
    %858 = vmatprep.subr.mxu0 0.0
    %859 = vmatpush1.msra.mxu0 %v820
    %860 = vmatprep.subr.mxu0 0.0
    %861 = vmatpush1.msra.mxu0 %v821
    %862 = vmatprep.subr.mxu0 0.0
    %863 = vmatpush1.msra.mxu0 0.0
    %864 = vmatprep.subr.mxu0 0.0
    %865 = vmatpush1.msra.mxu0 0.0
    %866 = vmatprep.subr.mxu0 0.0
    %867 = vmatpush1.msra.mxu0 0.0
    %868 = vmatprep.subr.mxu0 0.0
    %869 = vmatpush1.msra.mxu0 0.0
    %870 = vmatprep.subr.mxu0 0.0
    %871 = vmatpush1.msra.mxu0 0.0
    %872 = vmatprep.subr.mxu0 0.0
    %873 = vmatpush1.msra.mxu0 0.0
    %874 = vmatprep.subr.mxu0 0.0
    %875 = vmatpush1.msra.mxu0 0.0
    %876 = vmatprep.subr.mxu0 0.0
    %877 = vmatpush1.msra.mxu0 0.0
    %878 = vmatprep.subr.mxu0 0.0
    %879 = vmatpush1.msra.mxu0 0.0
    %880 = vmatprep.subr.mxu0 0.0
    %881 = vmatpush1.msra.mxu0 0.0
    %882 = vmatprep.subr.mxu0 0.0
    %883 = vmatpush1.msra.mxu0 0.0
    %884 = vmatprep.subr.mxu0 0.0
    %885 = vmatpush1.msra.mxu0 0.0
    %886 = vmatprep.subr.mxu0 0.0
    %887 = vmatpush1.msra.mxu0 0.0
    %888 = vmatprep.subr.mxu0 0.0
    %889 = vmatpush1.msra.mxu0 0.0
    %890 = vmatprep.subr.mxu0 0.0
    %891 = vmatpush1.msra.mxu0 0.0
    %892 = vmatprep.subr.mxu0 0.0
    %893 = vmatpush1.msra.mxu0 0.0
    %894 = vmatprep.mubr.f32.mxu0 0.0
    %895 = vmatmul.mubr.f32.gmra.mrb[0].mxu0 %v804
    %v896 = vpop.f32.mrb[0].mxu0
    %v897 = vadd.f32 %v828, %v896
    %v898 = vpop.f32.mrb[0].mxu0
    %899 = vdwg.mxu0
    %s900 = scalar_lea.vmem [#allocation10], 6
    %901 = vst [vmem:[%s900] sm:$0x3] %v897
    // Predicated region
    $region46: #{tpu_custom_call.1} parent=1 // pred_check
      _
    $region47: #{tpu_custom_call.1} parent=1 // pred_check_branch
      %903 = sbr.rel (0) target = $region49
    $region48: #{tpu_custom_call.1} parent=1 // pred_region
      %s905 = ssub.s32 128, 128
      %906 = vsyncadd [#allocation4], %s905
      %s907 = sshll.u32 [#allocation10], 4
      %s908 = int_to_ptr.vmem [resolvable:$true] %s907
      %913 = dma.vmem_to_hbm [thread:$0]  %s908, 128, %s7, [#allocation4], 32, 32, 2
    $region49: #{tpu_custom_call.1} parent=1 // pred_fallthru
      _
    // Predicated region
    $region50: #{tpu_custom_call.1} parent=1 // pred_check
      _
    $region51: #{tpu_custom_call.1} parent=1 // pred_check_branch
      %915 = sbr.rel (0) target = $region53
    $region52: #{tpu_custom_call.1} parent=1 // pred_region
      %916 = dma.done [#allocation4], 128
    $region53: #{tpu_custom_call.1} parent=1 // pred_fallthru
      _
    %917 = vsyncpa [#allocation3], 1
    %918 = vsyncpa [#allocation6], 1
    %919 = vsyncpa [#allocation9], 1
    %920 = vsyncpa [#allocation4], 1

</llo_original>
